<compile_context>
chip_gen: v7x
topology: tpu7x:2x2x1
jax: 0.10.0
libtpu: 0.0.40
codegen_flags: <defaults>
</compile_context>

<pallas_src>
import functools

import jax
import jax.numpy as jnp
from jax.experimental import pallas as pl
from jax.experimental.pallas import tpu as pltpu

LANE = 128
_NEG_BIG = 1e30  # additive mask value (f32); exp(-1e30 - finite) underflows to exactly 0


def _round_up(n, m):
    return ((n + m - 1) // m) * m


def _pad_2d(a, rows, cols):
    return jnp.zeros((rows, cols), jnp.float32).at[: a.shape[0], : a.shape[1]].set(a)


def _pad_1d(a, n):
    return jnp.zeros((n,), jnp.float32).at[: a.shape[0]].set(a)


# ----------------------------------------------------------------------------
# Fused Pallas kernel: all layers + pooling + classifier in one grid
# ----------------------------------------------------------------------------

def _gtn_fused_kernel(x_ref, mask_ref, w_ref, b_ref, g_ref, bt_ref,
                      pool_ref, wc_ref, bc_ref, logits_ref, h_ref, *,
                      c_pad, scale, eps):
    step = pl.program_id(0)
    last = pl.num_programs(0) - 1

    @pl.when(step == 0)
    def _():
        h_ref[...] = x_ref[...]                       # seed resident activations
        logits_ref[...] = jnp.zeros_like(logits_ref)  # defined output buffer

    xin = h_ref[...].astype(jnp.bfloat16)

    # Fused Q/K/V/skip projection: one MXU pass against the lane-dense [K, 4*c_pad] slab.
    qkvs = jnp.dot(xin, w_ref[...], preferred_element_type=jnp.float32) + b_ref[...]
    q = qkvs[:, 0 * c_pad:1 * c_pad]
    k = qkvs[:, 1 * c_pad:2 * c_pad]
    v = qkvs[:, 2 * c_pad:3 * c_pad]
    skip = qkvs[:, 3 * c_pad:4 * c_pad]

    # Scores: pre-scale q (N*C work, not N*N); contract last dims (no k.T / XLU transpose).
    qs = (q * scale).astype(jnp.bfloat16)
    s = jax.lax.dot_general(qs, k.astype(jnp.bfloat16),
                            (((1,), (1,)), ((), ())),
                            preferred_element_type=jnp.float32)

    # Edge mask: single compare+select; has_in_edge from the mask row-sum.
    edge_f = mask_ref[...].astype(jnp.float32)                      # 0/1
    s = jnp.where(edge_f > 0.5, s, -_NEG_BIG)
    has_in = jnp.minimum(jnp.sum(edge_f, axis=-1, keepdims=True), 1.0)

    # Softmax over incoming edges (row = destination node), f32.
    m = jnp.max(s, axis=-1, keepdims=True)
    p = jnp.exp(s - m)                       # masked entries underflow to exactly 0
    denom = jnp.sum(p, axis=-1, keepdims=True)
    inv = pl.reciprocal(denom, approx=True)  # EUP slot; ~2^-12 rel err

    attn = jnp.dot(p.astype(jnp.bfloat16), v.astype(jnp.bfloat16),
                   preferred_element_type=jnp.float32)
    h = attn * (inv * has_in) + skip         # + root/skip projection

    # BatchNorm1d (training-mode biased batch stats) + ReLU epilogue, f32.
    mean = jnp.mean(h, axis=0, keepdims=True)
    var = jnp.mean(jnp.square(h - mean), axis=0, keepdims=True)
    y = (h - mean) * jax.lax.rsqrt(var + eps) * g_ref[...] + bt_ref[...]
    h_new = jnp.maximum(y, 0.0)
    h_ref[...] = h_new                       # stays in VMEM for the next layer

    # Final step: global_mean_pool + classifier (0/1 one-hot sum, exact f32 1/count scale).
    @pl.when(step == last)
    def _():
        pool01 = pool_ref[...]                                           # [G_pad, N] 0/1
        counts = jnp.sum(pool01, axis=-1, keepdims=True)
        inv_cnt = 1.0 / jnp.maximum(counts, 1.0)
        pooled = jnp.dot(pool01.astype(jnp.bfloat16), h_new.astype(jnp.bfloat16),
                         preferred_element_type=jnp.float32) * inv_cnt
        logits_ref[...] = jnp.dot(pooled.astype(jnp.bfloat16), wc_ref[...],
                                  preferred_element_type=jnp.float32) + bc_ref[...]


def gtn_fused_forward(x_pad, mask_i8, prep, pool01, hidden_channels, eps=1e-5):
    N, P = x_pad.shape
    L = prep["w"].shape[0]
    g_pad, _ = pool01.shape
    o_pad = prep["wc"].shape[1]
    kern = functools.partial(_gtn_fused_kernel, c_pad=P,
                             scale=1.0 / float(hidden_channels) ** 0.5, eps=eps)
    return pl.pallas_call(
        kern,
        out_shape=jax.ShapeDtypeStruct((g_pad, o_pad), jnp.float32),
        grid_spec=pltpu.PrefetchScalarGridSpec(
            num_scalar_prefetch=0,
            grid=(L,),
            in_specs=[
                pl.BlockSpec((N, P), lambda l: (0, 0)),                 # x_pad (resident)
                pl.BlockSpec((N, N), lambda l: (0, 0)),                 # edge mask (resident)
                pl.BlockSpec((None, P, 4 * P), lambda l: (l, 0, 0)),    # per-layer weights
                pl.BlockSpec((None, 1, 4 * P), lambda l: (l, 0, 0)),    # per-layer bias
                pl.BlockSpec((None, 1, P), lambda l: (l, 0, 0)),        # per-layer gamma
                pl.BlockSpec((None, 1, P), lambda l: (l, 0, 0)),        # per-layer beta
                pl.BlockSpec((g_pad, N), lambda l: (0, 0)),             # 0/1 pool (resident)
                pl.BlockSpec((P, o_pad), lambda l: (0, 0)),             # classifier W
                pl.BlockSpec((1, o_pad), lambda l: (0, 0)),             # classifier b
            ],
            out_specs=pl.BlockSpec((g_pad, o_pad), lambda l: (0, 0)),   # resident output
            scratch_shapes=[pltpu.VMEM((N, P), jnp.float32)],           # activations h
        ),
        compiler_params=pltpu.CompilerParams(
            dimension_semantics=("arbitrary",)),       # layer axis is a sequential carry
    )(x_pad, mask_i8, prep["w"], prep["b"], prep["gamma"], prep["beta"],
      pool01, prep["wc"], prep["bc"])


# ----------------------------------------------------------------------------
# Parameter init (PyTorch-style) and fused/stacked parameter preparation
# ----------------------------------------------------------------------------

def _init_linear(key, fan_in, fan_out):
    k1, k2 = jax.random.split(key)
    bound = 1.0 / float(fan_in) ** 0.5
    w = jax.random.uniform(k1, (fan_in, fan_out), jnp.float32, -bound, bound)
    b = jax.random.uniform(k2, (fan_out,), jnp.float32, -bound, bound)
    return w, b


def _init_conv(key, in_ch, out_ch, heads):
    ks = jax.random.split(key, 4)
    wq, bq = _init_linear(ks[0], in_ch, heads * out_ch)
    wk, bk = _init_linear(ks[1], in_ch, heads * out_ch)
    wv, bv = _init_linear(ks[2], in_ch, heads * out_ch)
    ws, bs = _init_linear(ks[3], in_ch, heads * out_ch)
    return {"wq": wq, "bq": bq, "wk": wk, "bk": bk,
            "wv": wv, "bv": bv, "ws": ws, "bs": bs}


def _init_bn(num_features):
    return jnp.ones((num_features,), jnp.float32), jnp.zeros((num_features,), jnp.float32)


def init_gtn_params(key, hidden_channels, num_node_features, num_classes, num_layers, heads):
    assert heads == 1, "reference GTN only runs with heads == 1 (bn1 width mismatch otherwise)"
    keys = jax.random.split(key, 6 + num_layers)
    return {
        "linear": _init_linear(keys[0], num_node_features, num_node_features),
        "bn0": _init_bn(num_node_features),
        "conv1": _init_conv(keys[1], num_node_features, hidden_channels, heads),
        "bn1": _init_bn(heads * hidden_channels),
        "conv2": _init_conv(keys[2], heads * hidden_channels, hidden_channels, heads),
        "bn2": _init_bn(heads * hidden_channels),
        "conv3": _init_conv(keys[3], heads * hidden_channels, hidden_channels, heads),
        "bn3": _init_bn(heads * hidden_channels),
        "conv_list": [
            _init_conv(keys[4 + l], heads * hidden_channels, hidden_channels, 1)
            for l in range(num_layers)
        ],
        "bn_list": [_init_bn(heads * hidden_channels) for _ in range(num_layers)],
        "lin": _init_linear(keys[4 + num_layers], heads * hidden_channels, num_classes),
    }


def prepare_gtn_params(params, hidden_channels, num_node_features, num_classes,
                       num_layers, heads):
    """Stack all layers into [L, P, 4P] bf16 weight / [L,1,4P] bias / [L,1,P] gamma,beta."""
    assert num_node_features <= LANE and heads * hidden_channels <= LANE
    P = LANE
    o_pad = _round_up(num_classes, LANE)
    slots = (("wq", "bq"), ("wk", "bk"), ("wv", "bv"), ("ws", "bs"))

    def conv_slab(cp):
        w = jnp.zeros((P, 4 * P), jnp.float32)
        b = jnp.zeros((4 * P,), jnp.float32)
        for i, (wn, bn) in enumerate(slots):
            wi, bi = cp[wn], cp[bn]
            w = w.at[: wi.shape[0], i * P:i * P + wi.shape[1]].set(wi)
            b = b.at[i * P:i * P + bi.shape[0]].set(bi)
        return w, b

    def lin0_slab(w0, b0):
        # lin0 as a degenerate conv: weight/bias in the skip slot, q/k/v slots zero.
        w = jnp.zeros((P, 4 * P), jnp.float32)
        b = jnp.zeros((4 * P,), jnp.float32)
        w = w.at[: w0.shape[0], 3 * P:3 * P + w0.shape[1]].set(w0)
        b = b.at[3 * P:3 * P + b0.shape[0]].set(b0)
        return w, b

    w_list, b_list, g_list, bt_list = [], [], [], []
    w0, b0 = params["linear"]
    g0, be0 = params["bn0"]
    wl, bl = lin0_slab(w0, b0)
    w_list.append(wl); b_list.append(bl)
    g_list.append(_pad_1d(g0, P)); bt_list.append(_pad_1d(be0, P))

    convs = [params["conv1"], params["conv2"], params["conv3"]] + list(params["conv_list"])
    bns = [params["bn1"], params["bn2"], params["bn3"]] + list(params["bn_list"])
    for cp, (g, be) in zip(convs, bns):
        wl, bl = conv_slab(cp)
        w_list.append(wl); b_list.append(bl)
        g_list.append(_pad_1d(g, P)); bt_list.append(_pad_1d(be, P))

    w_lin, b_lin = params["lin"]
    return {
        "w": jnp.stack(w_list).astype(jnp.bfloat16),          # [L, P, 4P]
        "b": jnp.stack(b_list)[:, None, :],                    # [L, 1, 4P] f32
        "gamma": jnp.stack(g_list)[:, None, :],                # [L, 1, P] f32 (zero-padded)
        "beta": jnp.stack(bt_list)[:, None, :],                # [L, 1, P] f32 (zero-padded)
        "wc": _pad_2d(w_lin, P, o_pad).astype(jnp.bfloat16),   # [P, o_pad]
        "bc": _pad_1d(b_lin, o_pad).reshape(1, -1),            # [1, o_pad] f32
    }


# ----------------------------------------------------------------------------
# Forward pass (host-side prep: padding, dense mask, one-hot pooling matrix)
# ----------------------------------------------------------------------------

def gtn_forward(prep, x, edge_index, batch, num_graphs,
                hidden_channels, heads, num_layers, num_classes):
    N = x.shape[0]
    P = LANE
    assert N % 8 == 0  # TODO(synk): pad rows & exclude them from BN stats for general N.
    x_pad = jnp.zeros((N, P), jnp.float32).at[:, : x.shape[1]].set(x.astype(jnp.float32))

    # Dense int8 incoming-edge mask: mask[dst, src] = 1 iff edge src->dst.
    # (duplicate edges collapse via .set(); matches the "no duplicate edges" assumption)
    src, dst = edge_index[0], edge_index[1]
    mask_i8 = jnp.zeros((N, N), jnp.int32).at[dst, src].set(1).astype(jnp.int8)

    # 0/1 one-hot pooling matrix (exact in bf16); counts/means handled in-kernel.
    g_pad = _round_up(max(num_graphs, 8), 8)
    pool01 = jnp.zeros((g_pad, N), jnp.float32).at[batch, jnp.arange(N)].set(1.0)

    logits_pad = gtn_fused_forward(x_pad, mask_i8, prep, pool01, hidden_channels)
    return logits_pad[:num_graphs, :num_classes]


# ----------------------------------------------------------------------------
# Pure-JAX f32 reference (mirrors the PyTorch forward) for a tolerance check
# ----------------------------------------------------------------------------

def reference_forward(params, x, edge_index, batch, num_graphs, hidden_channels, eps=1e-5):
    def bn_relu(h, g, b):
        mean = jnp.mean(h, axis=0, keepdims=True)
        var = jnp.mean((h - mean) ** 2, axis=0, keepdims=True)
        return jnp.maximum((h - mean) * jax.lax.rsqrt(var + eps) * g + b, 0.0)

    N = x.shape[0]
    src, dst = edge_index[0], edge_index[1]
    mask = jnp.zeros((N, N), bool).at[dst, src].set(True)

    def conv(h, cp):
        q = h @ cp["wq"] + cp["bq"]
        k = h @ cp["wk"] + cp["bk"]
        v = h @ cp["wv"] + cp["bv"]
        skip = h @ cp["ws"] + cp["bs"]
        s = (q @ k.T) * (1.0 / float(hidden_channels) ** 0.5)
        s = jnp.where(mask, s, -_NEG_BIG)
        m = jnp.max(s, axis=-1, keepdims=True)
        p = jnp.where(mask, jnp.exp(s - m), 0.0)
        denom = jnp.sum(p, axis=-1, keepdims=True)
        has_in = (denom > 0.0).astype(jnp.float32)
        agg = (p @ v) / jnp.maximum(denom, 1e-30) * has_in
        return agg + skip

    w0, b0 = params["linear"]
    h = bn_relu(x @ w0 + b0, *params["bn0"])
    convs = [params["conv1"], params["conv2"], params["conv3"]] + list(params["conv_list"])
    bns = [params["bn1"], params["bn2"], params["bn3"]] + list(params["bn_list"])
    for cp, (g, b) in zip(convs, bns):
        h = bn_relu(conv(h, cp), g, b)
    pool = (batch[None, :] == jnp.arange(num_graphs)[:, None]).astype(jnp.float32)
    pooled = (pool @ h) / jnp.maximum(pool.sum(1, keepdims=True), 1.0)
    w_lin, b_lin = params["lin"]
    return pooled @ w_lin + b_lin


# ----------------------------------------------------------------------------
# Example run
# ----------------------------------------------------------------------------

if __name__ == "__main__":
    # Small deterministic problem: 2 graphs x 8 nodes, 8 features, hidden 16, 3 classes.
    num_node_features = 8
    hidden_channels = 16
    num_classes = 3
    num_layers = 2
    heads = 1
    nodes_per_graph = 8
    num_graphs = 2
    N = nodes_per_graph * num_graphs

    key = jax.random.PRNGKey(0)
    kx, kp = jax.random.split(key)
    x = jax.random.normal(kx, (N, num_node_features), dtype=jnp.float32)

    # Deterministic edges: bidirectional ring inside each graph.
    src_list, dst_list = [], []
    for g in range(num_graphs):
        base = g * nodes_per_graph
        for i in range(nodes_per_graph):
            j = (i + 1) % nodes_per_graph
            src_list += [base + i, base + j]
            dst_list += [base + j, base + i]
    edge_index = jnp.array([src_list, dst_list], dtype=jnp.int32)   # [2, 32]
    batch = jnp.repeat(jnp.arange(num_graphs, dtype=jnp.int32), nodes_per_graph)

    params = init_gtn_params(kp, hidden_channels, num_node_features,
                             num_classes, num_layers, heads)
    prep = prepare_gtn_params(params, hidden_channels, num_node_features,
                              num_classes, num_layers, heads)
    assert prep["w"].shape[0] == 1 + 3 + num_layers

    out = gtn_forward(prep, x, edge_index, batch, num_graphs,
                      hidden_channels, heads, num_layers, num_classes)
    out = jax.block_until_ready(out)
    assert out.shape == (num_graphs, num_classes)
    assert bool(jnp.all(jnp.isfinite(out)))

    # Tolerance test vs. the f32 reference (loose bound: bf16 MXU operands across 6 layers).
    ref = reference_forward(params, x.astype(jnp.float32), edge_index, batch,
                            num_graphs, hidden_channels)
    assert bool(jnp.allclose(out, ref, rtol=1e-1, atol=1e-1)), (out, ref)

    print("KERNEL_OK")
</pallas_src>

<mosaic_0001>
module attributes {stable_mosaic.version = 11 : i64} {
  func.func @_gtn_fused_kernel(%arg0: i32, %arg1: memref<16x128xf32, #tpu.memory_space<vmem>>, %arg2: memref<16x16xi8, #tpu.memory_space<vmem>>, %arg3: memref<1x128x512xbf16, #tpu.memory_space<vmem>>, %arg4: memref<1x1x512xf32, #tpu.memory_space<vmem>>, %arg5: memref<1x1x128xf32, #tpu.memory_space<vmem>>, %arg6: memref<1x1x128xf32, #tpu.memory_space<vmem>>, %arg7: memref<8x16xf32, #tpu.memory_space<vmem>>, %arg8: memref<128x128xbf16, #tpu.memory_space<vmem>>, %arg9: memref<1x128xf32, #tpu.memory_space<vmem>>, %arg10: memref<8x128xf32, #tpu.memory_space<vmem>>, %arg11: memref<16x128xf32, #tpu.memory_space<vmem>>) attributes {dimension_semantics = [#tpu.dimension_semantics<arbitrary>], iteration_bounds = array<i64: 6>, scalar_prefetch = 0 : i64, scratch_operands = 1 : i64, tpu.core_type = #tpu.core_type<tc>, window_params = [{pipeline_mode = #tpu.pipeline_mode<synchronous>, transform_indices = @transform_0, window_bounds = array<i64: 16, 128>}, {pipeline_mode = #tpu.pipeline_mode<synchronous>, transform_indices = @transform_1, window_bounds = array<i64: 16, 16>}, {transform_indices = @transform_2, window_bounds = array<i64: 1, 128, 512>}, {transform_indices = @transform_3, window_bounds = array<i64: 1, 1, 512>}, {transform_indices = @transform_4, window_bounds = array<i64: 1, 1, 128>}, {transform_indices = @transform_5, window_bounds = array<i64: 1, 1, 128>}, {pipeline_mode = #tpu.pipeline_mode<synchronous>, transform_indices = @transform_6, window_bounds = array<i64: 8, 16>}, {pipeline_mode = #tpu.pipeline_mode<synchronous>, transform_indices = @transform_7, window_bounds = array<i64: 128, 128>}, {pipeline_mode = #tpu.pipeline_mode<synchronous>, transform_indices = @transform_8, window_bounds = array<i64: 1, 128>}, {pipeline_mode = #tpu.pipeline_mode<synchronous>, transform_indices = @transform_9, window_bounds = array<i64: 8, 128>}]} {
    %c0_i32 = arith.constant 0 : i32
    %0 = arith.cmpi eq, %arg0, %c0_i32 : i32
    %1 = arith.extui %0 : i1 to i32
    %c0_i32_0 = arith.constant 0 : i32
    %2 = arith.cmpi ne, %1, %c0_i32_0 : i32
    scf.if %2 {
      %c0_34 = arith.constant 0 : index
      %c0_35 = arith.constant 0 : index
      %78 = vector.load %arg1[%c0_34, %c0_35] : memref<16x128xf32, #tpu.memory_space<vmem>>, vector<16x128xf32>
      %c0_36 = arith.constant 0 : index
      %c0_37 = arith.constant 0 : index
      %79 = vector.load %arg11[%c0_36, %c0_37] : memref<16x128xf32, #tpu.memory_space<vmem>>, vector<16x128xf32>
      tpu.vector_store %arg11[%c0_36, %c0_37], %78 {strides = array<i32>} : memref<16x128xf32, #tpu.memory_space<vmem>>, vector<16x128xf32>,
      %cst_38 = arith.constant 0.000000e+00 : f32
      %80 = vector.broadcast %cst_38 : f32 to vector<8x128xf32>
      %c0_39 = arith.constant 0 : index
      %c0_40 = arith.constant 0 : index
      %81 = vector.load %arg10[%c0_39, %c0_40] : memref<8x128xf32, #tpu.memory_space<vmem>>, vector<8x128xf32>
      tpu.vector_store %arg10[%c0_39, %c0_40], %80 {strides = array<i32>} : memref<8x128xf32, #tpu.memory_space<vmem>>, vector<8x128xf32>,
    } else {
    }
    %c0 = arith.constant 0 : index
    %c0_1 = arith.constant 0 : index
    %3 = vector.load %arg11[%c0, %c0_1] : memref<16x128xf32, #tpu.memory_space<vmem>>, vector<16x128xf32>
    %4 = arith.truncf %3 : vector<16x128xf32> to vector<16x128xbf16>
    %c0_2 = arith.constant 0 : index
    %c0_3 = arith.constant 0 : index
    %c0_4 = arith.constant 0 : index
    %5 = vector.load %arg3[%c0_2, %c0_3, %c0_4] : memref<1x128x512xbf16, #tpu.memory_space<vmem>>, vector<1x128x512xbf16>
    %6 = vector.shape_cast %5 : vector<1x128x512xbf16> to vector<128x512xbf16>
    %cst = arith.constant dense<0.000000e+00> : vector<16x512xf32>
    %7 = tpu.matmul %4, %6, %cst {dimension_numbers = #tpu.dot_dimension_numbers<[1], [0], [0], [1], [0, 0, 1, 1], [], []>} : vector<16x128xbf16>, vector<128x512xbf16>, vector<16x512xf32> -> vector<16x512xf32>
    %c0_5 = arith.constant 0 : index
    %c0_6 = arith.constant 0 : index
    %c0_7 = arith.constant 0 : index
    %8 = vector.load %arg4[%c0_5, %c0_6, %c0_7] : memref<1x1x512xf32, #tpu.memory_space<vmem>>, vector<1x1x512xf32>
    %9 = vector.shape_cast %8 : vector<1x1x512xf32> to vector<1x512xf32>
    %10 = vector.broadcast %9 : vector<1x512xf32> to vector<16x512xf32>
    %11 = arith.addf %7, %10 : vector<16x512xf32>
    %12 = vector.extract_strided_slice %11 {offsets = [0, 0], sizes = [16, 128], strides = [1, 1]} : vector<16x512xf32> to vector<16x128xf32>
    %13 = vector.extract_strided_slice %11 {offsets = [0, 128], sizes = [16, 128], strides = [1, 1]} : vector<16x512xf32> to vector<16x128xf32>
    %14 = vector.extract_strided_slice %11 {offsets = [0, 256], sizes = [16, 128], strides = [1, 1]} : vector<16x512xf32> to vector<16x128xf32>
    %15 = vector.extract_strided_slice %11 {offsets = [0, 384], sizes = [16, 128], strides = [1, 1]} : vector<16x512xf32> to vector<16x128xf32>
    %cst_8 = arith.constant 2.500000e-01 : f32
    %16 = vector.broadcast %cst_8 : f32 to vector<16x128xf32>
    %17 = arith.mulf %12, %16 : vector<16x128xf32>
    %18 = arith.truncf %17 : vector<16x128xf32> to vector<16x128xbf16>
    %19 = arith.truncf %13 : vector<16x128xf32> to vector<16x128xbf16>
    %cst_9 = arith.constant dense<0.000000e+00> : vector<16x16xf32>
    %20 = tpu.matmul %18, %19, %cst_9 {dimension_numbers = #tpu.dot_dimension_numbers<[1], [1], [0], [0], [0, 0, 1, 0], [], []>} : vector<16x128xbf16>, vector<16x128xbf16>, vector<16x16xf32> -> vector<16x16xf32>
    %c0_10 = arith.constant 0 : index
    %c0_11 = arith.constant 0 : index
    %21 = vector.load %arg2[%c0_10, %c0_11] : memref<16x16xi8, #tpu.memory_space<vmem>>, vector<16x16xi8>
    %22 = arith.sitofp %21 : vector<16x16xi8> to vector<16x16xf32>
    %cst_12 = arith.constant 5.000000e-01 : f32
    %23 = vector.broadcast %cst_12 : f32 to vector<16x16xf32>
    %24 = arith.cmpf ogt, %22, %23 : vector<16x16xf32>
    %cst_13 = arith.constant -1.000000e+30 : f32
    %25 = vector.broadcast %cst_13 : f32 to vector<16x16xf32>
    %26 = arith.select %24, %20, %25 : vector<16x16xi1>, vector<16x16xf32>
    %cst_14 = arith.constant dense<0.000000e+00> : vector<16xf32>
    %27 = vector.multi_reduction <add>, %22, %cst_14 [1] : vector<16x16xf32> to vector<16xf32>
    %28 = vector.shape_cast %27 : vector<16xf32> to vector<16x1xf32>
    %cst_15 = arith.constant 1.000000e+00 : f32
    %29 = vector.broadcast %cst_15 : f32 to vector<16x1xf32>
    %30 = arith.minimumf %28, %29 : vector<16x1xf32>
    %cst_16 = arith.constant dense<0xFF800000> : vector<16xf32>
    %31 = vector.multi_reduction <maximumf>, %26, %cst_16 [1] : vector<16x16xf32> to vector<16xf32>
    %32 = vector.shape_cast %31 : vector<16xf32> to vector<16x1xf32>
    %33 = vector.broadcast %32 : vector<16x1xf32> to vector<16x16xf32>
    %34 = arith.subf %26, %33 : vector<16x16xf32>
    %35 = math.exp %34 : vector<16x16xf32>
    %cst_17 = arith.constant dense<0.000000e+00> : vector<16xf32>
    %36 = vector.multi_reduction <add>, %35, %cst_17 [1] : vector<16x16xf32> to vector<16xf32>
    %37 = vector.shape_cast %36 : vector<16xf32> to vector<16x1xf32>
    %38 = tpu.reciprocal %37 {approx = true} : vector<16x1xf32> -> vector<16x1xf32>
    %39 = arith.truncf %35 : vector<16x16xf32> to vector<16x16xbf16>
    %40 = arith.truncf %14 : vector<16x128xf32> to vector<16x128xbf16>
    %cst_18 = arith.constant dense<0.000000e+00> : vector<16x128xf32>
    %41 = tpu.matmul %39, %40, %cst_18 {dimension_numbers = #tpu.dot_dimension_numbers<[1], [0], [0], [1], [0, 0, 1, 1], [], []>} : vector<16x16xbf16>, vector<16x128xbf16>, vector<16x128xf32> -> vector<16x128xf32>
    %42 = arith.mulf %38, %30 : vector<16x1xf32>
    %43 = vector.broadcast %42 : vector<16x1xf32> to vector<16x128xf32>
    %44 = arith.mulf %41, %43 : vector<16x128xf32>
    %45 = arith.addf %44, %15 : vector<16x128xf32>
    %cst_19 = arith.constant dense<0.000000e+00> : vector<128xf32>
    %46 = vector.multi_reduction <add>, %45, %cst_19 [0] : vector<16x128xf32> to vector<128xf32>
    %47 = vector.shape_cast %46 : vector<128xf32> to vector<1x128xf32>
    %cst_20 = arith.constant 1.600000e+01 : f32
    %48 = vector.broadcast %cst_20 : f32 to vector<1x128xf32>
    %49 = arith.divf %47, %48 : vector<1x128xf32>
    %50 = vector.broadcast %49 : vector<1x128xf32> to vector<16x128xf32>
    %51 = arith.subf %45, %50 : vector<16x128xf32>
    %52 = arith.mulf %51, %51 : vector<16x128xf32>
    %cst_21 = arith.constant dense<0.000000e+00> : vector<128xf32>
    %53 = vector.multi_reduction <add>, %52, %cst_21 [0] : vector<16x128xf32> to vector<128xf32>
    %54 = vector.shape_cast %53 : vector<128xf32> to vector<1x128xf32>
    %cst_22 = arith.constant 1.600000e+01 : f32
    %55 = vector.broadcast %cst_22 : f32 to vector<1x128xf32>
    %56 = arith.divf %54, %55 : vector<1x128xf32>
    %57 = vector.broadcast %49 : vector<1x128xf32> to vector<16x128xf32>
    %58 = arith.subf %45, %57 : vector<16x128xf32>
    %cst_23 = arith.constant 9.99999974E-6 : f32
    %59 = vector.broadcast %cst_23 : f32 to vector<1x128xf32>
    %60 = arith.addf %56, %59 : vector<1x128xf32>
    %61 = math.rsqrt %60 : vector<1x128xf32>
    %62 = vector.broadcast %61 : vector<1x128xf32> to vector<16x128xf32>
    %63 = arith.mulf %58, %62 : vector<16x128xf32>
    %c0_24 = arith.constant 0 : index
    %c0_25 = arith.constant 0 : index
    %c0_26 = arith.constant 0 : index
    %64 = vector.load %arg5[%c0_24, %c0_25, %c0_26] : memref<1x1x128xf32, #tpu.memory_space<vmem>>, vector<1x1x128xf32>
    %65 = vector.shape_cast %64 : vector<1x1x128xf32> to vector<1x128xf32>
    %66 = vector.broadcast %65 : vector<1x128xf32> to vector<16x128xf32>
    %67 = arith.mulf %63, %66 : vector<16x128xf32>
    %c0_27 = arith.constant 0 : index
    %c0_28 = arith.constant 0 : index
    %c0_29 = arith.constant 0 : index
    %68 = vector.load %arg6[%c0_27, %c0_28, %c0_29] : memref<1x1x128xf32, #tpu.memory_space<vmem>>, vector<1x1x128xf32>
    %69 = vector.shape_cast %68 : vector<1x1x128xf32> to vector<1x128xf32>
    %70 = vector.broadcast %69 : vector<1x128xf32> to vector<16x128xf32>
    %71 = arith.addf %67, %70 : vector<16x128xf32>
    %cst_30 = arith.constant 0.000000e+00 : f32
    %72 = vector.broadcast %cst_30 : f32 to vector<16x128xf32>
    %73 = arith.maximumf %71, %72 : vector<16x128xf32>
    %c0_31 = arith.constant 0 : index
    %c0_32 = arith.constant 0 : index
    %74 = vector.load %arg11[%c0_31, %c0_32] : memref<16x128xf32, #tpu.memory_space<vmem>>, vector<16x128xf32>
    tpu.vector_store %arg11[%c0_31, %c0_32], %73 {strides = array<i32>} : memref<16x128xf32, #tpu.memory_space<vmem>>, vector<16x128xf32>,
    %c5_i32 = arith.constant 5 : i32
    %75 = arith.cmpi eq, %arg0, %c5_i32 : i32
    %76 = arith.extui %75 : i1 to i32
    %c0_i32_33 = arith.constant 0 : i32
    %77 = arith.cmpi ne, %76, %c0_i32_33 : i32
    scf.if %77 {
      %c0_34 = arith.constant 0 : index
      %c0_35 = arith.constant 0 : index
      %78 = vector.load %arg7[%c0_34, %c0_35] : memref<8x16xf32, #tpu.memory_space<vmem>>, vector<8x16xf32>
      %cst_36 = arith.constant dense<0.000000e+00> : vector<8xf32>
      %79 = vector.multi_reduction <add>, %78, %cst_36 [1] : vector<8x16xf32> to vector<8xf32>
      %80 = vector.shape_cast %79 : vector<8xf32> to vector<8x1xf32>
      %cst_37 = arith.constant 1.000000e+00 : f32
      %81 = vector.broadcast %cst_37 : f32 to vector<8x1xf32>
      %82 = arith.maximumf %80, %81 : vector<8x1xf32>
      %cst_38 = arith.constant 1.000000e+00 : f32
      %83 = vector.broadcast %cst_38 : f32 to vector<8x1xf32>
      %84 = arith.divf %83, %82 : vector<8x1xf32>
      %85 = arith.truncf %78 : vector<8x16xf32> to vector<8x16xbf16>
      %86 = arith.truncf %73 : vector<16x128xf32> to vector<16x128xbf16>
      %cst_39 = arith.constant dense<0.000000e+00> : vector<8x128xf32>
      %87 = tpu.matmul %85, %86, %cst_39 {dimension_numbers = #tpu.dot_dimension_numbers<[1], [0], [0], [1], [0, 0, 1, 1], [], []>} : vector<8x16xbf16>, vector<16x128xbf16>, vector<8x128xf32> -> vector<8x128xf32>
      %88 = vector.broadcast %84 : vector<8x1xf32> to vector<8x128xf32>
      %89 = arith.mulf %87, %88 : vector<8x128xf32>
      %90 = arith.truncf %89 : vector<8x128xf32> to vector<8x128xbf16>
      %c0_40 = arith.constant 0 : index
      %c0_41 = arith.constant 0 : index
      %91 = vector.load %arg8[%c0_40, %c0_41] : memref<128x128xbf16, #tpu.memory_space<vmem>>, vector<128x128xbf16>
      %cst_42 = arith.constant dense<0.000000e+00> : vector<8x128xf32>
      %92 = tpu.matmul %90, %91, %cst_42 {dimension_numbers = #tpu.dot_dimension_numbers<[1], [0], [0], [1], [0, 0, 1, 1], [], []>} : vector<8x128xbf16>, vector<128x128xbf16>, vector<8x128xf32> -> vector<8x128xf32>
      %c0_43 = arith.constant 0 : index
      %c0_44 = arith.constant 0 : index
      %93 = vector.load %arg9[%c0_43, %c0_44] : memref<1x128xf32, #tpu.memory_space<vmem>>, vector<1x128xf32>
      %94 = vector.broadcast %93 : vector<1x128xf32> to vector<8x128xf32>
      %95 = arith.addf %92, %94 : vector<8x128xf32>
      %c0_45 = arith.constant 0 : index
      %c0_46 = arith.constant 0 : index
      %96 = vector.load %arg10[%c0_45, %c0_46] : memref<8x128xf32, #tpu.memory_space<vmem>>, vector<8x128xf32>
      tpu.vector_store %arg10[%c0_45, %c0_46], %95 {strides = array<i32>} : memref<8x128xf32, #tpu.memory_space<vmem>>, vector<8x128xf32>,
    } else {
    }
    return
  }
  func.func @transform_0(%arg0: i32) -> (i32, i32) {
    %c0_i32 = arith.constant 0 : i32
    %c0_i32_0 = arith.constant 0 : i32
    %c0_i32_1 = arith.constant 0 : i32
    return %c0_i32, %c0_i32_0 : i32, i32
  }
  func.func @transform_1(%arg0: i32) -> (i32, i32) {
    %c0_i32 = arith.constant 0 : i32
    %c0_i32_0 = arith.constant 0 : i32
    %c0_i32_1 = arith.constant 0 : i32
    return %c0_i32, %c0_i32_0 : i32, i32
  }
  func.func @transform_2(%arg0: i32) -> (i32, i32, i32) {
    %c0_i32 = arith.constant 0 : i32
    %c0_i32_0 = arith.constant 0 : i32
    %c0_i32_1 = arith.constant 0 : i32
    return %arg0, %c0_i32, %c0_i32_0 : i32, i32, i32
  }
  func.func @transform_3(%arg0: i32) -> (i32, i32, i32) {
    %c0_i32 = arith.constant 0 : i32
    %c0_i32_0 = arith.constant 0 : i32
    %c0_i32_1 = arith.constant 0 : i32
    return %arg0, %c0_i32, %c0_i32_0 : i32, i32, i32
  }
  func.func @transform_4(%arg0: i32) -> (i32, i32, i32) {
    %c0_i32 = arith.constant 0 : i32
    %c0_i32_0 = arith.constant 0 : i32
    %c0_i32_1 = arith.constant 0 : i32
    return %arg0, %c0_i32, %c0_i32_0 : i32, i32, i32
  }
  func.func @transform_5(%arg0: i32) -> (i32, i32, i32) {
    %c0_i32 = arith.constant 0 : i32
    %c0_i32_0 = arith.constant 0 : i32
    %c0_i32_1 = arith.constant 0 : i32
    return %arg0, %c0_i32, %c0_i32_0 : i32, i32, i32
  }
  func.func @transform_6(%arg0: i32) -> (i32, i32) {
    %c0_i32 = arith.constant 0 : i32
    %c0_i32_0 = arith.constant 0 : i32
    %c0_i32_1 = arith.constant 0 : i32
    return %c0_i32, %c0_i32_0 : i32, i32
  }
  func.func @transform_7(%arg0: i32) -> (i32, i32) {
    %c0_i32 = arith.constant 0 : i32
    %c0_i32_0 = arith.constant 0 : i32
    %c0_i32_1 = arith.constant 0 : i32
    return %c0_i32, %c0_i32_0 : i32, i32
  }
  func.func @transform_8(%arg0: i32) -> (i32, i32) {
    %c0_i32 = arith.constant 0 : i32
    %c0_i32_0 = arith.constant 0 : i32
    %c0_i32_1 = arith.constant 0 : i32
    return %c0_i32, %c0_i32_0 : i32, i32
  }
  func.func @transform_9(%arg0: i32) -> (i32, i32) {
    %c0_i32 = arith.constant 0 : i32
    %c0_i32_0 = arith.constant 0 : i32
    %c0_i32_1 = arith.constant 0 : i32
    return %c0_i32, %c0_i32_0 : i32, i32
  }
}

</mosaic_0001>

<llo_original>
// kernel: tpu_custom_call.1
$region0: #{tpu_custom_call.1}
  #allocation0 [shape = 'u32[]', space=smem, size = 0x4, offset = 0x4, fixed_abs, tag = 'smem constant byte address 0x4 - core index']
  #allocation1 [shape = 'u32[144,128]{1,0:T(1,128)}', space=vmem, size = 0x12000, scoped, tag = 'internal scratch']
  #allocation2 [shape = 'f32[16,128]{1,0:T(8,128)}', space=vmem, size = 0x2000, scoped, tag = 'scratch operand']
  %s0 = inlined_call_operand.hbm [shape: f32[16,128], index: 0, kind: input, shape index: {}]
  %s1 = inlined_call_operand.hbm [shape: s8[16,16], index: 1, kind: input, shape index: {}]
  %s2 = inlined_call_operand.hbm [shape: bf16[6,128,512], index: 2, kind: input, shape index: {}]
  %s3 = inlined_call_operand.hbm [shape: f32[6,1,512], index: 3, kind: input, shape index: {}]
  %s4 = inlined_call_operand.vmem [shape: f32[6,1,128], index: 4, kind: input, shape index: {}]
  %s5 = inlined_call_operand.hbm [shape: f32[6,1,128], index: 5, kind: input, shape index: {}]
  %s6 = inlined_call_operand.vmem [shape: f32[8,16], index: 6, kind: input, shape index: {}]
  %s7 = inlined_call_operand.hbm [shape: bf16[128,128], index: 7, kind: input, shape index: {}]
  %s8 = inlined_call_operand.vmem [shape: f32[1,128], index: 8, kind: input, shape index: {}]
  %s9 = inlined_call_operand.hbm [shape: f32[8,128], index: 9, kind: output, shape index: {}]
  %s10 = sld [smem:[#allocation0]]
  $region101: #{tpu_custom_call.1} parent=0
    _
  %s12 = ssub.s32 1, %s10
  %s13 = scalar_select 0, %s12, %s10
  $region1: #{tpu_custom_call.1} parent=0
    #allocation3 [shape = 'u8[8192]{0}', space=vmem, size = 0x2000, scoped, tag = 'input window, operand 0, single buffered']
    #allocation4 [shape = 's32[2]{0}', space=sflag, size = 0x8, scoped, tag = 'scoped memory for tpu_custom_call.1']
    #allocation5 [shape = 's32[2]{0}', space=sflag, size = 0x8, scoped, tag = 'scoped memory for tpu_custom_call.1']
    #allocation6 [shape = 'u8[2048]{0}', space=vmem, size = 0x800, scoped, tag = 'input window, operand 1, single buffered']
    #allocation7 [shape = 's32[1]{0}', space=sflag, size = 0x4, scoped, tag = 'scoped memory for tpu_custom_call.1']
    #allocation8 [shape = 'u8[262144]{0}', space=vmem, size = 0x40000, scoped, tag = 'input window, operand 2']
    #allocation9 [shape = 'u8[4096]{0}', space=vmem, size = 0x1000, scoped, tag = 'input window, operand 3']
    #allocation10 [shape = 'u8[1024]{0}', space=vmem, size = 0x400, scoped, tag = 'input window, operand 5']
    #allocation11 [shape = 'u8[32768]{0}', space=vmem, size = 0x8000, scoped, tag = 'input window, operand 7, single buffered']
    #allocation12 [shape = 'u8[4096]{0}', space=vmem, size = 0x1000, scoped, tag = 'output window, operand 0, single buffered']
    %14 = vsyncpa [#allocation4], 0
    %15 = vsyncpa [#allocation7], 0
    %16 = vsyncpa [#allocation5], 0
    loop: start=0, step=1, limit=8
    $region2: #{tpu_custom_call.1} parent=1 // loop_pre_header
      _
    $region3: #{tpu_custom_call.1} parent=1 // loop_header
      %s18 = sphi 0, %s22
      %p19 = scmp.ge.s32.totalorder %s18, 8
      %s26 = sphi 0, %s26
      %s28 = sphi 0, %s26
      %s29 = sphi 0, %s28
      %s43 = sphi 0, %s29
      %s47 = sphi 0, %s47
      %s49 = sphi 0, %s47
      %s50 = sphi 0, %s49
      %s64 = sphi 0, %s50
      %s70 = sphi 0, %s72
      %s73 = sphi 0, %s70
      %s74 = sphi 0, %s73
      %s90 = sphi 0, %s74
      %s96 = sphi 0, %s98
      %s99 = sphi 0, %s96
      %s100 = sphi 0, %s99
      %s116 = sphi 0, %s100
      %s122 = sphi 0, %s124
      %s125 = sphi 0, %s122
      %s126 = sphi 0, %s125
      %s142 = sphi 0, %s126
      %s148 = sphi 0, %s150
      %s151 = sphi 0, %s148
      %s152 = sphi 0, %s151
      %s168 = sphi 0, %s152
      %s172 = sphi 0, %s172
      %s174 = sphi 0, %s172
      %s175 = sphi 0, %s174
      %s189 = sphi 0, %s175
      %s193 = sphi 0, %s193
      %s195 = sphi 0, %s193
      %s196 = sphi 0, %s195
      %s210 = sphi 0, %s196
      %s214 = sphi 0, %s214
      %s216 = sphi 0, %s214
      %s217 = sphi 0, %s216
      %s231 = sphi 0, %s217
      %s235 = sphi 0, %s235
      %s237 = sphi 0, %s235
      %s238 = sphi 0, %s237
      %s252 = sphi 0, %s238
    $region4: #{tpu_custom_call.1} parent=1 // loop_header_branch
      %21 = sbr.rel (%p19) target = $region8
    $region5: #{tpu_custom_call.1} parent=1 // loop_body
      %s23 = ssub.s32 %s18, 1
      %s24 = ssub.s32 %s18, 2
      %s25 = sadd.s32 %s18, 1
      %s27 = sadd.s32 %s26, 1
      %p30 = scmp.eq.s32.totalorder %s18, 5
      %p31 = scmp.ne.s32.totalorder %s26, %s28
      %p32 = scmp.eq.s32.totalorder %s18, 0
      %p33 = por %p31, %p32
      %p34 = scmp.ne.s32.totalorder %s26, %s28
      %p35 = scmp.eq.s32.totalorder %s23, 5
      %p36 = por %p34, %p35
      %p37 = scmp.ne.s32.totalorder %s28, %s29
      %p38 = scmp.eq.s32.totalorder %s23, 0
      %p39 = por %p37, %p38
      %p40 = scmp.ne.s32.totalorder %s28, %s29
      %p41 = scmp.eq.s32.totalorder %s24, 5
      %p42 = por %p40, %p41
      %p44 = scmp.ne.s32.totalorder %s29, %s43
      %p45 = scmp.eq.s32.totalorder %s24, 0
      %p46 = por %p44, %p45
      %s48 = sadd.s32 %s47, 1
      %p51 = scmp.eq.s32.totalorder %s18, 5
      %p52 = scmp.ne.s32.totalorder %s47, %s49
      %p53 = scmp.eq.s32.totalorder %s18, 0
      %p54 = por %p52, %p53
      %p55 = scmp.ne.s32.totalorder %s47, %s49
      %p56 = scmp.eq.s32.totalorder %s23, 5
      %p57 = por %p55, %p56
      %p58 = scmp.ne.s32.totalorder %s49, %s50
      %p59 = scmp.eq.s32.totalorder %s23, 0
      %p60 = por %p58, %p59
      %p61 = scmp.ne.s32.totalorder %s49, %s50
      %p62 = scmp.eq.s32.totalorder %s24, 5
      %p63 = por %p61, %p62
      %p65 = scmp.ne.s32.totalorder %s50, %s64
      %p66 = scmp.eq.s32.totalorder %s24, 0
      %p67 = por %p65, %p66
      %s68 = ssub.s32 %s18, %s25
      %p69 = scmp.eq.s32.totalorder %s68, 0
      %s71 = sadd.s32 %s70, 1
      %s72 = scalar_select %p69, %s70, %s71
      %p75 = pneg %p69
      %p76 = scmp.eq.s32.totalorder %s18, 5
      %p77 = por %p75, %p76
      %p78 = scmp.ne.s32.totalorder %s70, %s73
      %p79 = scmp.eq.s32.totalorder %s18, 0
      %p80 = por %p78, %p79
      %p81 = scmp.ne.s32.totalorder %s70, %s73
      %p82 = scmp.eq.s32.totalorder %s23, 5
      %p83 = por %p81, %p82
      %p84 = scmp.ne.s32.totalorder %s73, %s74
      %p85 = scmp.eq.s32.totalorder %s23, 0
      %p86 = por %p84, %p85
      %p87 = scmp.ne.s32.totalorder %s73, %s74
      %p88 = scmp.eq.s32.totalorder %s24, 5
      %p89 = por %p87, %p88
      %p91 = scmp.ne.s32.totalorder %s74, %s90
      %p92 = scmp.eq.s32.totalorder %s24, 0
      %p93 = por %p91, %p92
      %s94 = ssub.s32 %s18, %s25
      %p95 = scmp.eq.s32.totalorder %s94, 0
      %s97 = sadd.s32 %s96, 1
      %s98 = scalar_select %p95, %s96, %s97
      %p101 = pneg %p95
      %p102 = scmp.eq.s32.totalorder %s18, 5
      %p103 = por %p101, %p102
      %p104 = scmp.ne.s32.totalorder %s96, %s99
      %p105 = scmp.eq.s32.totalorder %s18, 0
      %p106 = por %p104, %p105
      %p107 = scmp.ne.s32.totalorder %s96, %s99
      %p108 = scmp.eq.s32.totalorder %s23, 5
      %p109 = por %p107, %p108
      %p110 = scmp.ne.s32.totalorder %s99, %s100
      %p111 = scmp.eq.s32.totalorder %s23, 0
      %p112 = por %p110, %p111
      %p113 = scmp.ne.s32.totalorder %s99, %s100
      %p114 = scmp.eq.s32.totalorder %s24, 5
      %p115 = por %p113, %p114
      %p117 = scmp.ne.s32.totalorder %s100, %s116
      %p118 = scmp.eq.s32.totalorder %s24, 0
      %p119 = por %p117, %p118
      %s120 = ssub.s32 %s18, %s25
      %p121 = scmp.eq.s32.totalorder %s120, 0
      %s123 = sadd.s32 %s122, 1
      %s124 = scalar_select %p121, %s122, %s123
      %p127 = pneg %p121
      %p128 = scmp.eq.s32.totalorder %s18, 5
      %p129 = por %p127, %p128
      %p130 = scmp.ne.s32.totalorder %s122, %s125
      %p131 = scmp.eq.s32.totalorder %s18, 0
      %p132 = por %p130, %p131
      %p133 = scmp.ne.s32.totalorder %s122, %s125
      %p134 = scmp.eq.s32.totalorder %s23, 5
      %p135 = por %p133, %p134
      %p136 = scmp.ne.s32.totalorder %s125, %s126
      %p137 = scmp.eq.s32.totalorder %s23, 0
      %p138 = por %p136, %p137
      %p139 = scmp.ne.s32.totalorder %s125, %s126
      %p140 = scmp.eq.s32.totalorder %s24, 5
      %p141 = por %p139, %p140
      %p143 = scmp.ne.s32.totalorder %s126, %s142
      %p144 = scmp.eq.s32.totalorder %s24, 0
      %p145 = por %p143, %p144
      %s146 = ssub.s32 %s18, %s25
      %p147 = scmp.eq.s32.totalorder %s146, 0
      %s149 = sadd.s32 %s148, 1
      %s150 = scalar_select %p147, %s148, %s149
      %p153 = pneg %p147
      %p154 = scmp.eq.s32.totalorder %s18, 5
      %p155 = por %p153, %p154
      %p156 = scmp.ne.s32.totalorder %s148, %s151
      %p157 = scmp.eq.s32.totalorder %s18, 0
      %p158 = por %p156, %p157
      %p159 = scmp.ne.s32.totalorder %s148, %s151
      %p160 = scmp.eq.s32.totalorder %s23, 5
      %p161 = por %p159, %p160
      %p162 = scmp.ne.s32.totalorder %s151, %s152
      %p163 = scmp.eq.s32.totalorder %s23, 0
      %p164 = por %p162, %p163
      %p165 = scmp.ne.s32.totalorder %s151, %s152
      %p166 = scmp.eq.s32.totalorder %s24, 5
      %p167 = por %p165, %p166
      %p169 = scmp.ne.s32.totalorder %s152, %s168
      %p170 = scmp.eq.s32.totalorder %s24, 0
      %p171 = por %p169, %p170
      %s173 = sadd.s32 %s172, 1
      %p176 = scmp.eq.s32.totalorder %s18, 5
      %p177 = scmp.ne.s32.totalorder %s172, %s174
      %p178 = scmp.eq.s32.totalorder %s18, 0
      %p179 = por %p177, %p178
      %p180 = scmp.ne.s32.totalorder %s172, %s174
      %p181 = scmp.eq.s32.totalorder %s23, 5
      %p182 = por %p180, %p181
      %p183 = scmp.ne.s32.totalorder %s174, %s175
      %p184 = scmp.eq.s32.totalorder %s23, 0
      %p185 = por %p183, %p184
      %p186 = scmp.ne.s32.totalorder %s174, %s175
      %p187 = scmp.eq.s32.totalorder %s24, 5
      %p188 = por %p186, %p187
      %p190 = scmp.ne.s32.totalorder %s175, %s189
      %p191 = scmp.eq.s32.totalorder %s24, 0
      %p192 = por %p190, %p191
      %s194 = sadd.s32 %s193, 1
      %p197 = scmp.eq.s32.totalorder %s18, 5
      %p198 = scmp.ne.s32.totalorder %s193, %s195
      %p199 = scmp.eq.s32.totalorder %s18, 0
      %p200 = por %p198, %p199
      %p201 = scmp.ne.s32.totalorder %s193, %s195
      %p202 = scmp.eq.s32.totalorder %s23, 5
      %p203 = por %p201, %p202
      %p204 = scmp.ne.s32.totalorder %s195, %s196
      %p205 = scmp.eq.s32.totalorder %s23, 0
      %p206 = por %p204, %p205
      %p207 = scmp.ne.s32.totalorder %s195, %s196
      %p208 = scmp.eq.s32.totalorder %s24, 5
      %p209 = por %p207, %p208
      %p211 = scmp.ne.s32.totalorder %s196, %s210
      %p212 = scmp.eq.s32.totalorder %s24, 0
      %p213 = por %p211, %p212
      %s215 = sadd.s32 %s214, 1
      %p218 = scmp.eq.s32.totalorder %s18, 5
      %p219 = scmp.ne.s32.totalorder %s214, %s216
      %p220 = scmp.eq.s32.totalorder %s18, 0
      %p221 = por %p219, %p220
      %p222 = scmp.ne.s32.totalorder %s214, %s216
      %p223 = scmp.eq.s32.totalorder %s23, 5
      %p224 = por %p222, %p223
      %p225 = scmp.ne.s32.totalorder %s216, %s217
      %p226 = scmp.eq.s32.totalorder %s23, 0
      %p227 = por %p225, %p226
      %p228 = scmp.ne.s32.totalorder %s216, %s217
      %p229 = scmp.eq.s32.totalorder %s24, 5
      %p230 = por %p228, %p229
      %p232 = scmp.ne.s32.totalorder %s217, %s231
      %p233 = scmp.eq.s32.totalorder %s24, 0
      %p234 = por %p232, %p233
      %s236 = sadd.s32 %s235, 1
      %p239 = scmp.eq.s32.totalorder %s18, 5
      %p240 = scmp.ne.s32.totalorder %s235, %s237
      %p241 = scmp.eq.s32.totalorder %s18, 0
      %p242 = por %p240, %p241
      %p243 = scmp.ne.s32.totalorder %s235, %s237
      %p244 = scmp.eq.s32.totalorder %s23, 5
      %p245 = por %p243, %p244
      %p246 = scmp.ne.s32.totalorder %s237, %s238
      %p247 = scmp.eq.s32.totalorder %s23, 0
      %p248 = por %p246, %p247
      %p249 = scmp.ne.s32.totalorder %s237, %s238
      %p250 = scmp.eq.s32.totalorder %s24, 5
      %p251 = por %p249, %p250
      %p253 = scmp.ne.s32.totalorder %s238, %s252
      %p254 = scmp.eq.s32.totalorder %s24, 0
      %p255 = por %p253, %p254
      %p256 = scmp.le.s32.totalorder 1, %s18
      %p257 = scmp.lt.s32.totalorder %s18, 7
      %p258 = pnand %p256, %p257
      %p259 = pneg %p258
      // Predicated region
      $region9: #{tpu_custom_call.1} parent=5 // pred_check
        _
      $region10: #{tpu_custom_call.1} parent=5 // pred_check_branch
        %261 = sbr.rel (%p258) target = $region12
      $region11: #{tpu_custom_call.1} parent=5 // pred_region
        %s262 = ssub.s32 %s18, 1
        // Predicated region
        $region13: #{tpu_custom_call.1} parent=11 // pred_check
          %p263 = pneg %p39
        $region14: #{tpu_custom_call.1} parent=11 // pred_check_branch
          %265 = sbr.rel (%p263) target = $region16
        $region15: #{tpu_custom_call.1} parent=11 // pred_region
          %s267 = ssub.s32 256, 256
          %268 = vsyncadd [#allocation4], %s267
          %s269 = sshll.u32 [#allocation3], 4
          %s270 = int_to_ptr.vmem [resolvable:$true] %s269
          %275 = dma.hbm_to_vmem [thread:$0]  %s0, 256, %s270, [#allocation4], 128, 128, 8
        $region16: #{tpu_custom_call.1} parent=11 // pred_fallthru
          _
        // Predicated region
        $region17: #{tpu_custom_call.1} parent=11 // pred_check
          %p276 = pneg %p60
        $region18: #{tpu_custom_call.1} parent=11 // pred_check_branch
          %278 = sbr.rel (%p276) target = $region20
        $region19: #{tpu_custom_call.1} parent=11 // pred_region
          %s280 = ssub.s32 64, 64
          %281 = vsyncadd [#allocation7], %s280
          %s282 = sshll.u32 [#allocation6], 4
          %s283 = int_to_ptr.vmem [resolvable:$true] %s282
          %288 = dma.hbm_to_vmem [thread:$0]  %s1, 64, %s283, [#allocation7], 32, 32, 2
        $region20: #{tpu_custom_call.1} parent=11 // pred_fallthru
          _
        // Predicated region
        $region21: #{tpu_custom_call.1} parent=11 // pred_check
          %p289 = pneg %p185
        $region22: #{tpu_custom_call.1} parent=11 // pred_check_branch
          %291 = sbr.rel (%p289) target = $region24
        $region23: #{tpu_custom_call.1} parent=11 // pred_region
          _
        $region24: #{tpu_custom_call.1} parent=11 // pred_fallthru
          _
        // Predicated region
        $region25: #{tpu_custom_call.1} parent=11 // pred_check
          %p292 = pneg %p206
        $region26: #{tpu_custom_call.1} parent=11 // pred_check_branch
          %294 = sbr.rel (%p292) target = $region28
        $region27: #{tpu_custom_call.1} parent=11 // pred_region
          %s296 = ssub.s32 1024, 1024
          %297 = vsyncadd [#allocation7], %s296
          %s298 = sshll.u32 [#allocation11], 4
          %s299 = int_to_ptr.vmem [resolvable:$true] %s298
          %304 = dma.hbm_to_vmem [thread:$0]  %s7, 1024, %s299, [#allocation7], 64, 64, 4
        $region28: #{tpu_custom_call.1} parent=11 // pred_fallthru
          _
        // Predicated region
        $region29: #{tpu_custom_call.1} parent=11 // pred_check
          %p305 = pneg %p227
        $region30: #{tpu_custom_call.1} parent=11 // pred_check_branch
          %307 = sbr.rel (%p305) target = $region32
        $region31: #{tpu_custom_call.1} parent=11 // pred_region
          _
        $region32: #{tpu_custom_call.1} parent=11 // pred_fallthru
          _
      $region12: #{tpu_custom_call.1} parent=5 // pred_fallthru
        _
      %p308 = scmp.lt.s32.totalorder %s18, 6
      // Predicated region
      $region33: #{tpu_custom_call.1} parent=5 // pred_check
        %p309 = pneg %p308
      $region34: #{tpu_custom_call.1} parent=5 // pred_check_branch
        %311 = sbr.rel (%p309) target = $region36
      $region35: #{tpu_custom_call.1} parent=5 // pred_region
        // Predicated region
        $region37: #{tpu_custom_call.1} parent=35 // pred_check
          %p312 = pneg %p80
        $region38: #{tpu_custom_call.1} parent=35 // pred_check_branch
          %314 = sbr.rel (%p312) target = $region40
        $region39: #{tpu_custom_call.1} parent=35 // pred_region
          %s315 = sand.u32 %s18, 1
          %s316 = scalar_lea.sflag [#allocation4], %s315
          %s317 = sand.u32 %s70, 1
          %s318 = smul.addr %s317, 256
          %s319 = scalar_lea.vmem [#allocation8], %s318
          %s321 = ssub.s32 4096, 4096
          %322 = vsyncadd %s316, %s321
          %s323 = smul.addr %s18, 64
          %s324 = smul.addr %s323, 64
          %s325 = scalar_lea.hbm %s2, %s324
          %s326 = sshll.u32 %s319, 4
          %s327 = int_to_ptr.vmem [resolvable:$true] %s326
          %332 = dma.hbm_to_vmem [thread:$0]  %s325, 4096, %s327, %s316, 256, 256, 16
        $region40: #{tpu_custom_call.1} parent=35 // pred_fallthru
          _
        // Predicated region
        $region41: #{tpu_custom_call.1} parent=35 // pred_check
          %p333 = pneg %p106
        $region42: #{tpu_custom_call.1} parent=35 // pred_check_branch
          %335 = sbr.rel (%p333) target = $region44
        $region43: #{tpu_custom_call.1} parent=35 // pred_region
          %s336 = sand.u32 %s18, 1
          %s337 = scalar_lea.sflag [#allocation4], %s336
          %s338 = sand.u32 %s96, 1
          %s339 = smul.addr %s338, 4
          %s340 = scalar_lea.vmem [#allocation9], %s339
          %s342 = ssub.s32 64, 64
          %343 = vsyncadd %s337, %s342
          %s344 = smul.addr %s18, 4
          %s345 = smul.addr %s344, 16
          %s346 = scalar_lea.hbm %s3, %s345
          %s348 = sshll.u32 %s340, 4
          %s349 = int_to_ptr.vmem [resolvable:$true] %s348
          %351 = dma.hbm_to_vmem [thread:$0]  %s346, 64, %s349, %s337
        $region44: #{tpu_custom_call.1} parent=35 // pred_fallthru
          _
        // Predicated region
        $region45: #{tpu_custom_call.1} parent=35 // pred_check
          %p352 = pneg %p132
        $region46: #{tpu_custom_call.1} parent=35 // pred_check_branch
          %354 = sbr.rel (%p352) target = $region48
        $region47: #{tpu_custom_call.1} parent=35 // pred_region
          %p355 = scmp.lt.s32.totalorder %s18, 5
          %s356 = scalar_select %p355, %s18, 5
          %s357 = scalar_lea.vmem %s4, %s356
        $region48: #{tpu_custom_call.1} parent=35 // pred_fallthru
          _
        // Predicated region
        $region49: #{tpu_custom_call.1} parent=35 // pred_check
          %p358 = pneg %p158
        $region50: #{tpu_custom_call.1} parent=35 // pred_check_branch
          %360 = sbr.rel (%p358) target = $region52
        $region51: #{tpu_custom_call.1} parent=35 // pred_region
          %s361 = sand.u32 %s18, 1
          %s362 = scalar_lea.sflag [#allocation4], %s361
          %s363 = sand.u32 %s148, 1
          %s364 = scalar_lea.vmem [#allocation10], %s363
          %s366 = ssub.s32 16, 16
          %367 = vsyncadd %s362, %s366
          %s368 = smul.addr %s18, 16
          %s369 = scalar_lea.hbm %s5, %s368
          %s371 = sshll.u32 %s364, 4
          %s372 = int_to_ptr.vmem [resolvable:$true] %s371
          %374 = dma.hbm_to_vmem [thread:$0]  %s369, 16, %s372, %s362
        $region52: #{tpu_custom_call.1} parent=35 // pred_fallthru
          _
      $region36: #{tpu_custom_call.1} parent=5 // pred_fallthru
        _
      %p375 = scmp.le.s32.totalorder 1, %s18
      %p376 = scmp.lt.s32.totalorder %s18, 7
      %p377 = pnand %p375, %p376
      %p378 = pneg %p377
      // Predicated region
      $region53: #{tpu_custom_call.1} parent=5 // pred_check
        _
      $region54: #{tpu_custom_call.1} parent=5 // pred_check_branch
        %380 = sbr.rel (%p377) target = $region56
      $region55: #{tpu_custom_call.1} parent=5 // pred_region
        %s381 = ssub.s32 %s18, 1
        // Predicated region
        $region57: #{tpu_custom_call.1} parent=55 // pred_check
          %p382 = pneg %p39
        $region58: #{tpu_custom_call.1} parent=55 // pred_check_branch
          %384 = sbr.rel (%p382) target = $region60
        $region59: #{tpu_custom_call.1} parent=55 // pred_region
          %385 = dma.done [#allocation4], 256
        $region60: #{tpu_custom_call.1} parent=55 // pred_fallthru
          _
        // Predicated region
        $region61: #{tpu_custom_call.1} parent=55 // pred_check
          %p386 = pneg %p60
        $region62: #{tpu_custom_call.1} parent=55 // pred_check_branch
          %388 = sbr.rel (%p386) target = $region64
        $region63: #{tpu_custom_call.1} parent=55 // pred_region
          %389 = dma.done [#allocation7], 64
        $region64: #{tpu_custom_call.1} parent=55 // pred_fallthru
          _
        %s390 = sand.u32 %s23, 1
        %s391 = scalar_lea.sflag [#allocation4], %s390
        %s392 = sand.u32 %s73, 1
        %s393 = smul.addr %s392, 256
        %s394 = scalar_lea.vmem [#allocation8], %s393
        // Predicated region
        $region65: #{tpu_custom_call.1} parent=55 // pred_check
          %p395 = pneg %p86
        $region66: #{tpu_custom_call.1} parent=55 // pred_check_branch
          %397 = sbr.rel (%p395) target = $region68
        $region67: #{tpu_custom_call.1} parent=55 // pred_region
          %398 = dma.done %s391, 4096
        $region68: #{tpu_custom_call.1} parent=55 // pred_fallthru
          _
        %s399 = sand.u32 %s23, 1
        %s400 = scalar_lea.sflag [#allocation4], %s399
        %s401 = sand.u32 %s99, 1
        %s402 = smul.addr %s401, 4
        %s403 = scalar_lea.vmem [#allocation9], %s402
        // Predicated region
        $region69: #{tpu_custom_call.1} parent=55 // pred_check
          %p404 = pneg %p112
        $region70: #{tpu_custom_call.1} parent=55 // pred_check_branch
          %406 = sbr.rel (%p404) target = $region72
        $region71: #{tpu_custom_call.1} parent=55 // pred_region
          %407 = dma.done %s400, 64
        $region72: #{tpu_custom_call.1} parent=55 // pred_fallthru
          _
        %s408 = sand.u32 %s23, 1
        %s409 = scalar_lea.sflag [#allocation4], %s408
        %s410 = sand.u32 %s151, 1
        %s411 = scalar_lea.vmem [#allocation10], %s410
        // Predicated region
        $region73: #{tpu_custom_call.1} parent=55 // pred_check
          %p412 = pneg %p164
        $region74: #{tpu_custom_call.1} parent=55 // pred_check_branch
          %414 = sbr.rel (%p412) target = $region76
        $region75: #{tpu_custom_call.1} parent=55 // pred_region
          %415 = dma.done %s409, 16
        $region76: #{tpu_custom_call.1} parent=55 // pred_fallthru
          _
        // Predicated region
        $region77: #{tpu_custom_call.1} parent=55 // pred_check
          %p416 = pneg %p206
        $region78: #{tpu_custom_call.1} parent=55 // pred_check_branch
          %418 = sbr.rel (%p416) target = $region80
        $region79: #{tpu_custom_call.1} parent=55 // pred_region
          %419 = dma.done [#allocation7], 1024
        $region80: #{tpu_custom_call.1} parent=55 // pred_fallthru
          _
        %p420 = pneg %p39
        %p421 = pneg %p36
        %p422 = pneg %p60
        %p423 = pneg %p57
        %s424 = sand.u32 %s23, 1
        %s425 = scalar_lea.sflag [#allocation4], %s424
        %s426 = sand.u32 %s73, 1
        %s427 = smul.addr %s426, 256
        %s428 = scalar_lea.vmem [#allocation8], %s427
        %p429 = pneg %p86
        %p430 = pneg %p83
        %s431 = sand.u32 %s23, 1
        %s432 = scalar_lea.sflag [#allocation4], %s431
        %s433 = sand.u32 %s99, 1
        %s434 = smul.addr %s433, 4
        %s435 = scalar_lea.vmem [#allocation9], %s434
        %p436 = pneg %p112
        %p437 = pneg %p109
        %p438 = scmp.lt.s32.totalorder %s23, 5
        %s439 = scalar_select %p438, %s23, 5
        %s440 = scalar_lea.vmem %s4, %s439
        %p441 = pneg %p138
        %p442 = pneg %p135
        %s443 = sand.u32 %s23, 1
        %s444 = scalar_lea.sflag [#allocation4], %s443
        %s445 = sand.u32 %s151, 1
        %s446 = scalar_lea.vmem [#allocation10], %s445
        %p447 = pneg %p164
        %p448 = pneg %p161
        %p449 = pneg %p185
        %p450 = pneg %p182
        %p451 = pneg %p206
        %p452 = pneg %p203
        %p453 = pneg %p227
        %p454 = pneg %p224
        %p455 = pneg %p248
        %p456 = pneg %p245
        %p457 = scmp.lt.s32.totalorder %s23, 5
        %s458 = scalar_select %p457, %s23, 5
        %s459 = scalar_lea.vmem %s4, %s458
        %p461 = scmp.eq.s32.totalorder %s23, 0
        // Predicated region
        $region81: #{tpu_custom_call.1} parent=55 // pred_check
          %p462 = pneg %p461
        $region82: #{tpu_custom_call.1} parent=55 // pred_check_branch
          %464 = sbr.rel (%p462) target = $region84
        $region83: #{tpu_custom_call.1} parent=55 // pred_region
          %v465 = vld [vmem:[#allocation3] sm:$0xff]
          %v466 = vld [vmem:[#allocation3 + $0x8] sm:$0xff]
          %467 = vst [vmem:[#allocation2] sm:$0xff] %v465
          %468 = vst [vmem:[#allocation2 + $0x8] sm:$0xff] %v466
          %469 = vst [vmem:[#allocation12] sm:$0xff] 0.0
        $region84: #{tpu_custom_call.1} parent=55 // pred_fallthru
          _
        %v470 = vld [vmem:[#allocation2] sm:$0xff]
        %v471 = vld [vmem:[#allocation2 + $0x8] sm:$0xff]
        %v472 = vpack.c.bf16 %v471, %v470
        %v473 = vld [vmem:[%s394] sm:$0xff]
        %v474 = vld [vmem:[%s394 + $0x8] sm:$0xff]
        %v475 = vld [vmem:[%s394 + $0x10] sm:$0xff]
        %v476 = vld [vmem:[%s394 + $0x18] sm:$0xff]
        %v477 = vld [vmem:[%s394 + $0x20] sm:$0xff]
        %v478 = vld [vmem:[%s394 + $0x28] sm:$0xff]
        %v479 = vld [vmem:[%s394 + $0x30] sm:$0xff]
        %v480 = vld [vmem:[%s394 + $0x38] sm:$0xff]
        %v481 = vld [vmem:[%s394 + $0x40] sm:$0xff]
        %v482 = vld [vmem:[%s394 + $0x48] sm:$0xff]
        %v483 = vld [vmem:[%s394 + $0x50] sm:$0xff]
        %v484 = vld [vmem:[%s394 + $0x58] sm:$0xff]
        %v485 = vld [vmem:[%s394 + $0x60] sm:$0xff]
        %v486 = vld [vmem:[%s394 + $0x68] sm:$0xff]
        %v487 = vld [vmem:[%s394 + $0x70] sm:$0xff]
        %v488 = vld [vmem:[%s394 + $0x78] sm:$0xff]
        %v489 = vld [vmem:[%s394 + $0x80] sm:$0xff]
        %v490 = vld [vmem:[%s394 + $0x88] sm:$0xff]
        %v491 = vld [vmem:[%s394 + $0x90] sm:$0xff]
        %v492 = vld [vmem:[%s394 + $0x98] sm:$0xff]
        %v493 = vld [vmem:[%s394 + $0xa0] sm:$0xff]
        %v494 = vld [vmem:[%s394 + $0xa8] sm:$0xff]
        %v495 = vld [vmem:[%s394 + $0xb0] sm:$0xff]
        %v496 = vld [vmem:[%s394 + $0xb8] sm:$0xff]
        %v497 = vld [vmem:[%s394 + $0xc0] sm:$0xff]
        %v498 = vld [vmem:[%s394 + $0xc8] sm:$0xff]
        %v499 = vld [vmem:[%s394 + $0xd0] sm:$0xff]
        %v500 = vld [vmem:[%s394 + $0xd8] sm:$0xff]
        %v501 = vld [vmem:[%s394 + $0xe0] sm:$0xff]
        %v502 = vld [vmem:[%s394 + $0xe8] sm:$0xff]
        %v503 = vld [vmem:[%s394 + $0xf0] sm:$0xff]
        %v504 = vld [vmem:[%s394 + $0xf8] sm:$0xff]
        %v505 = vld [vmem:[%s403] sm:$0xf]
        %v507 = vlaneseq
        %v508 = vshrl.u32 %v507, 7
        %v509 = vsub.s32 0, %v508
        %v510 = vrot.slane %v505, %v509
        %v511 = vlaneseq
        %v512 = vshrl.u32 %v511, 7
        %v513 = vsub.s32 1, %v512
        %v514 = vrot.slane %v505, %v513
        %v515 = vlaneseq
        %v516 = vshrl.u32 %v515, 7
        %v517 = vsub.s32 2, %v516
        %v518 = vrot.slane %v505, %v517
        %v519 = vlaneseq
        %v520 = vshrl.u32 %v519, 7
        %v521 = vsub.s32 3, %v520
        %v522 = vrot.slane %v505, %v521
        %v559 = vunpack.c.l.b16 %v473
        %v560 = vunpack.c.h.b16 %v473
        %v561 = vunpack.c.l.b16 %v474
        %v562 = vunpack.c.h.b16 %v474
        %v563 = vunpack.c.l.b16 %v475
        %v564 = vunpack.c.h.b16 %v475
        %v565 = vunpack.c.l.b16 %v476
        %v566 = vunpack.c.h.b16 %v476
        %v567 = vunpack.c.l.b16 %v477
        %v568 = vunpack.c.h.b16 %v477
        %v569 = vunpack.c.l.b16 %v478
        %v570 = vunpack.c.h.b16 %v478
        %v571 = vunpack.c.l.b16 %v479
        %v572 = vunpack.c.h.b16 %v479
        %v573 = vunpack.c.l.b16 %v480
        %v574 = vunpack.c.h.b16 %v480
        %v575 = vunpack.c.l.b16 %v481
        %v576 = vunpack.c.h.b16 %v481
        %v577 = vunpack.c.l.b16 %v482
        %v578 = vunpack.c.h.b16 %v482
        %v579 = vunpack.c.l.b16 %v483
        %v580 = vunpack.c.h.b16 %v483
        %v581 = vunpack.c.l.b16 %v484
        %v582 = vunpack.c.h.b16 %v484
        %v583 = vunpack.c.l.b16 %v485
        %v584 = vunpack.c.h.b16 %v485
        %v585 = vunpack.c.l.b16 %v486
        %v586 = vunpack.c.h.b16 %v486
        %v587 = vunpack.c.l.b16 %v487
        %v588 = vunpack.c.h.b16 %v487
        %v589 = vunpack.c.l.b16 %v488
        %v590 = vunpack.c.h.b16 %v488
        %v591 = vunpack.c.l.b16 %v489
        %v592 = vunpack.c.h.b16 %v489
        %v593 = vunpack.c.l.b16 %v490
        %v594 = vunpack.c.h.b16 %v490
        %v595 = vunpack.c.l.b16 %v491
        %v596 = vunpack.c.h.b16 %v491
        %v597 = vunpack.c.l.b16 %v492
        %v598 = vunpack.c.h.b16 %v492
        %v599 = vunpack.c.l.b16 %v493
        %v600 = vunpack.c.h.b16 %v493
        %v601 = vunpack.c.l.b16 %v494
        %v602 = vunpack.c.h.b16 %v494
        %v603 = vunpack.c.l.b16 %v495
        %v604 = vunpack.c.h.b16 %v495
        %v605 = vunpack.c.l.b16 %v496
        %v606 = vunpack.c.h.b16 %v496
        %v607 = vunpack.c.l.b16 %v497
        %v608 = vunpack.c.h.b16 %v497
        %v609 = vunpack.c.l.b16 %v498
        %v610 = vunpack.c.h.b16 %v498
        %v611 = vunpack.c.l.b16 %v499
        %v612 = vunpack.c.h.b16 %v499
        %v613 = vunpack.c.l.b16 %v500
        %v614 = vunpack.c.h.b16 %v500
        %v615 = vunpack.c.l.b16 %v501
        %v616 = vunpack.c.h.b16 %v501
        %v617 = vunpack.c.l.b16 %v502
        %v618 = vunpack.c.h.b16 %v502
        %v619 = vunpack.c.l.b16 %v503
        %v620 = vunpack.c.h.b16 %v503
        %v621 = vunpack.c.l.b16 %v504
        %v622 = vunpack.c.h.b16 %v504
        %v623 = vpack.c.b16 %v563, %v559
        %v624 = vpack.c.b16 %v564, %v560
        %v625 = vpack.c.b16 %v565, %v561
        %v626 = vpack.c.b16 %v566, %v562
        %v627 = vpack.c.b16 %v571, %v567
        %v628 = vpack.c.b16 %v572, %v568
        %v629 = vpack.c.b16 %v573, %v569
        %v630 = vpack.c.b16 %v574, %v570
        %v631 = vpack.c.b16 %v579, %v575
        %v632 = vpack.c.b16 %v580, %v576
        %v633 = vpack.c.b16 %v581, %v577
        %v634 = vpack.c.b16 %v582, %v578
        %v635 = vpack.c.b16 %v587, %v583
        %v636 = vpack.c.b16 %v588, %v584
        %v637 = vpack.c.b16 %v589, %v585
        %v638 = vpack.c.b16 %v590, %v586
        %v639 = vpack.c.b16 %v595, %v591
        %v640 = vpack.c.b16 %v596, %v592
        %v641 = vpack.c.b16 %v597, %v593
        %v642 = vpack.c.b16 %v598, %v594
        %v643 = vpack.c.b16 %v603, %v599
        %v644 = vpack.c.b16 %v604, %v600
        %v645 = vpack.c.b16 %v605, %v601
        %v646 = vpack.c.b16 %v606, %v602
        %v647 = vpack.c.b16 %v611, %v607
        %v648 = vpack.c.b16 %v612, %v608
        %v649 = vpack.c.b16 %v613, %v609
        %v650 = vpack.c.b16 %v614, %v610
        %v651 = vpack.c.b16 %v619, %v615
        %v652 = vpack.c.b16 %v620, %v616
        %v653 = vpack.c.b16 %v621, %v617
        %v654 = vpack.c.b16 %v622, %v618
        %687 = vmatprep.subr.bf16.mxu0 %v624
        %688 = vmatpush1.bf16.msra.mxu0 %v623
        %689 = vmatprep.subr.bf16.mxu0 %v628
        %690 = vmatpush1.bf16.msra.mxu0 %v627
        %691 = vmatprep.subr.bf16.mxu0 %v632
        %692 = vmatpush1.bf16.msra.mxu0 %v631
        %693 = vmatprep.subr.bf16.mxu0 %v636
        %694 = vmatpush1.bf16.msra.mxu0 %v635
        %695 = vmatprep.subr.bf16.mxu0 %v640
        %696 = vmatpush1.bf16.msra.mxu0 %v639
        %697 = vmatprep.subr.bf16.mxu0 %v644
        %698 = vmatpush1.bf16.msra.mxu0 %v643
        %699 = vmatprep.subr.bf16.mxu0 %v648
        %700 = vmatpush1.bf16.msra.mxu0 %v647
        %701 = vmatprep.subr.bf16.mxu0 %v652
        %702 = vmatpush1.bf16.msra.mxu0 %v651
        %703 = vmatprep.subr.bf16.mxu0 0
        %704 = vmatpush1.bf16.msra.mxu0 0
        %705 = vmatprep.subr.bf16.mxu0 0
        %706 = vmatpush1.bf16.msra.mxu0 0
        %707 = vmatprep.subr.bf16.mxu0 0
        %708 = vmatpush1.bf16.msra.mxu0 0
        %709 = vmatprep.subr.bf16.mxu0 0
        %710 = vmatpush1.bf16.msra.mxu0 0
        %711 = vmatprep.subr.bf16.mxu0 0
        %712 = vmatpush1.bf16.msra.mxu0 0
        %713 = vmatprep.subr.bf16.mxu0 0
        %714 = vmatpush1.bf16.msra.mxu0 0
        %715 = vmatprep.subr.bf16.mxu0 0
        %716 = vmatpush1.bf16.msra.mxu0 0
        %717 = vmatprep.subr.bf16.mxu0 0
        %718 = vmatpush1.bf16.msra.mxu0 0
        %719 = vmatprep.mubr.bf16.mxu0 0
        %720 = vmatmul.mubr.bf16.gmra.mrb[0].mxu0 %v472
        %v721 = vpop.f32.mrb[0].mxu0
        %v722 = vadd.f32 %v510, %v721
        %v723 = vpop.f32.mrb[0].mxu0
        %v724 = vadd.f32 %v514, %v723
        %v725 = vpop.f32.mrb[0].mxu0
        %v726 = vadd.f32 %v510, %v725
        %v727 = vpop.f32.mrb[0].mxu0
        %v728 = vadd.f32 %v514, %v727
        %729 = vdwg.mxu0
        %730 = vmatprep.subr.bf16.mxu0 %v626
        %731 = vmatpush1.bf16.msra.mxu0 %v625
        %732 = vmatprep.subr.bf16.mxu0 %v630
        %733 = vmatpush1.bf16.msra.mxu0 %v629
        %734 = vmatprep.subr.bf16.mxu0 %v634
        %735 = vmatpush1.bf16.msra.mxu0 %v633
        %736 = vmatprep.subr.bf16.mxu0 %v638
        %737 = vmatpush1.bf16.msra.mxu0 %v637
        %738 = vmatprep.subr.bf16.mxu0 %v642
        %739 = vmatpush1.bf16.msra.mxu0 %v641
        %740 = vmatprep.subr.bf16.mxu0 %v646
        %741 = vmatpush1.bf16.msra.mxu0 %v645
        %742 = vmatprep.subr.bf16.mxu0 %v650
        %743 = vmatpush1.bf16.msra.mxu0 %v649
        %744 = vmatprep.subr.bf16.mxu0 %v654
        %745 = vmatpush1.bf16.msra.mxu0 %v653
        %746 = vmatprep.subr.bf16.mxu0 0
        %747 = vmatpush1.bf16.msra.mxu0 0
        %748 = vmatprep.subr.bf16.mxu0 0
        %749 = vmatpush1.bf16.msra.mxu0 0
        %750 = vmatprep.subr.bf16.mxu0 0
        %751 = vmatpush1.bf16.msra.mxu0 0
        %752 = vmatprep.subr.bf16.mxu0 0
        %753 = vmatpush1.bf16.msra.mxu0 0
        %754 = vmatprep.subr.bf16.mxu0 0
        %755 = vmatpush1.bf16.msra.mxu0 0
        %756 = vmatprep.subr.bf16.mxu0 0
        %757 = vmatpush1.bf16.msra.mxu0 0
        %758 = vmatprep.subr.bf16.mxu0 0
        %759 = vmatpush1.bf16.msra.mxu0 0
        %760 = vmatprep.subr.bf16.mxu0 0
        %761 = vmatpush1.bf16.msra.mxu0 0
        %762 = vmatprep.mubr.bf16.mxu0 0
        %763 = vmatmul.mubr.bf16.gmra.mrb[0].mxu0 %v472
        %v764 = vpop.f32.mrb[0].mxu0
        %v765 = vadd.f32 %v518, %v764
        %v766 = vpop.f32.mrb[0].mxu0
        %v767 = vadd.f32 %v522, %v766
        %v768 = vpop.f32.mrb[0].mxu0
        %v769 = vadd.f32 %v518, %v768
        %v770 = vpop.f32.mrb[0].mxu0
        %v771 = vadd.f32 %v522, %v770
        %772 = vdwg.mxu0
        %v773 = vmul.f32 %v722, 0.25
        %v774 = vmul.f32 %v726, 0.25
        %v775 = vpack.c.bf16 %v774, %v773
        %v776 = vpack.c.bf16 %v728, %v724
        %777 = vmatprep.subr.bf16.mxu0 0
        %778 = vmatpush1.bf16.xpose.msra.mxu0 %v776
        %779 = vmatprep.subr.bf16.mxu0 0
        %780 = vmatpush1.bf16.xpose.msra.mxu0 0
        %781 = vmatprep.subr.bf16.mxu0 0
        %782 = vmatpush1.bf16.xpose.msra.mxu0 0
        %783 = vmatprep.subr.bf16.mxu0 0
        %784 = vmatpush1.bf16.xpose.msra.mxu0 0
        %785 = vmatprep.subr.bf16.mxu0 0
        %786 = vmatpush1.bf16.xpose.msra.mxu0 0
        %787 = vmatprep.subr.bf16.mxu0 0
        %788 = vmatpush1.bf16.xpose.msra.mxu0 0
        %789 = vmatprep.subr.bf16.mxu0 0
        %790 = vmatpush1.bf16.xpose.msra.mxu0 0
        %791 = vmatprep.subr.bf16.mxu0 0
        %792 = vmatpush1.bf16.xpose.msra.mxu0 0
        %793 = vmatprep.subr.bf16.mxu0 0
        %794 = vmatpush1.bf16.xpose.msra.mxu0 0
        %795 = vmatprep.subr.bf16.mxu0 0
        %796 = vmatpush1.bf16.xpose.msra.mxu0 0
        %797 = vmatprep.subr.bf16.mxu0 0
        %798 = vmatpush1.bf16.xpose.msra.mxu0 0
        %799 = vmatprep.subr.bf16.mxu0 0
        %800 = vmatpush1.bf16.xpose.msra.mxu0 0
        %801 = vmatprep.subr.bf16.mxu0 0
        %802 = vmatpush1.bf16.xpose.msra.mxu0 0
        %803 = vmatprep.subr.bf16.mxu0 0
        %804 = vmatpush1.bf16.xpose.msra.mxu0 0
        %805 = vmatprep.subr.bf16.mxu0 0
        %806 = vmatpush1.bf16.xpose.msra.mxu0 0
        %807 = vmatprep.subr.bf16.mxu0 0
        %808 = vmatpush1.bf16.xpose.msra.mxu0 0
        %809 = vmatprep.mubr.bf16.mxu0 0
        %810 = vmatmul.mubr.bf16.gmra.mrb[0].mxu0 %v775
        %v811 = vpop.f32.mrb[0].mxu0
        %v812 = vadd.f32 0.0, %v811
        %v813 = vpop.f32.mrb[0].mxu0
        %v814 = vpop.f32.mrb[0].mxu0
        %v815 = vadd.f32 0.0, %v814
        %v816 = vpop.f32.mrb[0].mxu0
        %817 = vdwg.mxu0
        %v818 = vld [vmem:[#allocation6] sm:$0x3]
        %v819 = vld [vmem:[#allocation6 + $0x2] sm:$0x3]
        %v820 = vunpack.c.0.s8 %v818
        %v821 = vunpack.c.0.s8 %v819
        %v822 = vcvt.s32.f32 %v820
        %v823 = vcvt.s32.f32 %v821
        %vm824 = vcmp.gt.f32.partialorder %v822, 0.5
        %vm825 = vcmp.gt.f32.partialorder %v823, 0.5
        %v826 = vsel %vm824, %v812, -1e+30
        %v827 = vsel %vm825, %v815, -1e+30
        %vm828 = vcmask 130048
        %v829 = vsel %vm828, %v822, 0.0
        %830 = vadd.xlane.f32.xlu0 %v829
        %v831 = vpop.xlane.xlu0 %830
        %v832 = vsel %vm828, %v823, 0.0
        %833 = vadd.xlane.f32.xlu0 %v832
        %v834 = vpop.xlane.xlu0 %833
        %v835 = vmin.f32 %v831, 1.0
        %v836 = vmin.f32 %v834, 1.0
        %v837 = vsel %vm828, %v826, -inf
        %838 = vmax.xlane.f32.xlu0 %v837
        %v839 = vpop.xlane.xlu0 %838
        %v840 = vsel %vm828, %v827, -inf
        %841 = vmax.xlane.f32.xlu0 %v840
        %v842 = vpop.xlane.xlu0 %841
        %v843 = vsub.f32 %v826, %v839
        %v844 = vsub.f32 %v827, %v842
        %v845 = vmul.f32 %v843, 1.442695
        %v846 = vpow.pop %v845
        %v847 = vmul.f32 %v844, 1.442695
        %v848 = vpow.pop %v847
        %v849 = vsel %vm828, %v846, 0.0
        %850 = vadd.xlane.f32.xlu0 %v849
        %v851 = vpop.xlane.xlu0 %850
        %v852 = vsel %vm828, %v848, 0.0
        %853 = vadd.xlane.f32.xlu0 %v852
        %v854 = vpop.xlane.xlu0 %853
        %v855 = vrcp.pop %v851
        %v856 = vrcp.pop %v854
        %v857 = vpack.c.bf16 %v848, %v846
        %v858 = vpack.c.bf16 %v769, %v765
        %v860 = vsel %vm828, %v857, 0
        %862 = vmatprep.subr.bf16.mxu0 0
        %863 = vmatpush1.bf16.msra.mxu0 %v858
        %864 = vmatprep.subr.bf16.mxu0 0
        %865 = vmatpush1.bf16.msra.mxu0 0
        %866 = vmatprep.subr.bf16.mxu0 0
        %867 = vmatpush1.bf16.msra.mxu0 0
        %868 = vmatprep.subr.bf16.mxu0 0
        %869 = vmatpush1.bf16.msra.mxu0 0
        %870 = vmatprep.subr.bf16.mxu0 0
        %871 = vmatpush1.bf16.msra.mxu0 0
        %872 = vmatprep.subr.bf16.mxu0 0
        %873 = vmatpush1.bf16.msra.mxu0 0
        %874 = vmatprep.subr.bf16.mxu0 0
        %875 = vmatpush1.bf16.msra.mxu0 0
        %876 = vmatprep.subr.bf16.mxu0 0
        %877 = vmatpush1.bf16.msra.mxu0 0
        %878 = vmatprep.subr.bf16.mxu0 0
        %879 = vmatpush1.bf16.msra.mxu0 0
        %880 = vmatprep.subr.bf16.mxu0 0
        %881 = vmatpush1.bf16.msra.mxu0 0
        %882 = vmatprep.subr.bf16.mxu0 0
        %883 = vmatpush1.bf16.msra.mxu0 0
        %884 = vmatprep.subr.bf16.mxu0 0
        %885 = vmatpush1.bf16.msra.mxu0 0
        %886 = vmatprep.subr.bf16.mxu0 0
        %887 = vmatpush1.bf16.msra.mxu0 0
        %888 = vmatprep.subr.bf16.mxu0 0
        %889 = vmatpush1.bf16.msra.mxu0 0
        %890 = vmatprep.subr.bf16.mxu0 0
        %891 = vmatpush1.bf16.msra.mxu0 0
        %892 = vmatprep.subr.bf16.mxu0 0
        %893 = vmatpush1.bf16.msra.mxu0 0
        %894 = vmatprep.mubr.bf16.mxu0 0
        %895 = vmatmul.mubr.bf16.gmra.mrb[0].mxu0 %v860
        %v896 = vpop.f32.mrb[0].mxu0
        %v897 = vadd.f32 0.0, %v896
        %v898 = vpop.f32.mrb[0].mxu0
        %v899 = vpop.f32.mrb[0].mxu0
        %v900 = vadd.f32 0.0, %v899
        %v901 = vpop.f32.mrb[0].mxu0
        %902 = vdwg.mxu0
        %v903 = vmul.f32 %v855, %v835
        %v904 = vmul.f32 %v856, %v836
        %v905 = vmul.f32 %v897, %v903
        %v906 = vmul.f32 %v900, %v904
        %v907 = vadd.f32 %v905, %v767
        %v908 = vadd.f32 %v906, %v771
        %v909 = vadd.f32 %v907, %v908
        %v910 = vrot.slane %v909, 4
        %v911 = vadd.f32 %v909, %v910
        %v912 = vrot.slane %v911, 2
        %v913 = vadd.f32 %v911, %v912
        %v914 = vrot.slane %v913, 1
        %v915 = vadd.f32 %v913, %v914
        %v916 = vrcp.pop 16.0
        %v917 = vmul.f32 %v915, %v916
        %v918 = vsub.f32 %v907, %v917
        %v919 = vsub.f32 %v908, %v917
        %v920 = vmul.f32 %v918, %v918
        %v921 = vmul.f32 %v919, %v919
        %v922 = vadd.f32 %v920, %v921
        %v923 = vrot.slane %v922, 4
        %v924 = vadd.f32 %v922, %v923
        %v925 = vrot.slane %v924, 2
        %v926 = vadd.f32 %v924, %v925
        %v927 = vrot.slane %v926, 1
        %v928 = vadd.f32 %v926, %v927
        %v929 = vmul.f32 %v928, %v916
        %v930 = vadd.f32 %v929, 1e-05
        %v931 = vrsqrt.pop %v930
        %v932 = vmul.f32 %v918, %v931
        %v933 = vmul.f32 %v919, %v931
        %v934 = vld [vmem:[%s459] sm:$0x1]
        %v936 = vlaneseq
        %v937 = vshrl.u32 %v936, 7
        %v938 = vsub.s32 0, %v937
        %v939 = vrot.slane %v934, %v938
        %v941 = vmul.f32 %v932, %v939
        %v942 = vmul.f32 %v933, %v939
        %v943 = vld [vmem:[%s411] sm:$0x1]
        %v945 = vlaneseq
        %v946 = vshrl.u32 %v945, 7
        %v947 = vsub.s32 0, %v946
        %v948 = vrot.slane %v943, %v947
        %v950 = vadd.f32 %v941, %v948
        %v951 = vadd.f32 %v942, %v948
        %v952 = vmax.f32 %v950, 0.0
        %v953 = vmax.f32 %v951, 0.0
        %954 = vst [vmem:[#allocation2] sm:$0xff] %v952
        %955 = vst [vmem:[#allocation2 + $0x8] sm:$0xff] %v953
        %p956 = scmp.eq.s32.totalorder %s23, 5
        // Predicated region
        $region85: #{tpu_custom_call.1} parent=55 // pred_check
          %p957 = pneg %p956
        $region86: #{tpu_custom_call.1} parent=55 // pred_check_branch
          %959 = sbr.rel (%p957) target = $region88
        $region87: #{tpu_custom_call.1} parent=55 // pred_region
          %v960 = vld [vmem:[%s6] sm:$0xff]
          %v961 = vsel %vm828, %v960, 0.0
          %962 = vadd.xlane.f32.xlu0 %v961
          %v963 = vpop.xlane.xlu0 %962
          %v964 = vmax.f32 %v963, 1.0
          %v965 = vrcp.pop %v964
          %v966 = vmul.f32 1.0, %v965
          %v967 = vpack.c.bf16 %v960, %v960
          %v968 = vpack.c.bf16 %v953, %v952
          %v970 = vsel %vm828, %v967, 0
          %972 = vmatprep.subr.bf16.mxu0 0
          %973 = vmatpush1.bf16.msra.mxu0 %v968
          %974 = vmatprep.subr.bf16.mxu0 0
          %975 = vmatpush1.bf16.msra.mxu0 0
          %976 = vmatprep.subr.bf16.mxu0 0
          %977 = vmatpush1.bf16.msra.mxu0 0
          %978 = vmatprep.subr.bf16.mxu0 0
          %979 = vmatpush1.bf16.msra.mxu0 0
          %980 = vmatprep.subr.bf16.mxu0 0
          %981 = vmatpush1.bf16.msra.mxu0 0
          %982 = vmatprep.subr.bf16.mxu0 0
          %983 = vmatpush1.bf16.msra.mxu0 0
          %984 = vmatprep.subr.bf16.mxu0 0
          %985 = vmatpush1.bf16.msra.mxu0 0
          %986 = vmatprep.subr.bf16.mxu0 0
          %987 = vmatpush1.bf16.msra.mxu0 0
          %988 = vmatprep.subr.bf16.mxu0 0
          %989 = vmatpush1.bf16.msra.mxu0 0
          %990 = vmatprep.subr.bf16.mxu0 0
          %991 = vmatpush1.bf16.msra.mxu0 0
          %992 = vmatprep.subr.bf16.mxu0 0
          %993 = vmatpush1.bf16.msra.mxu0 0
          %994 = vmatprep.subr.bf16.mxu0 0
          %995 = vmatpush1.bf16.msra.mxu0 0
          %996 = vmatprep.subr.bf16.mxu0 0
          %997 = vmatpush1.bf16.msra.mxu0 0
          %998 = vmatprep.subr.bf16.mxu0 0
          %999 = vmatpush1.bf16.msra.mxu0 0
          %1000 = vmatprep.subr.bf16.mxu0 0
          %1001 = vmatpush1.bf16.msra.mxu0 0
          %1002 = vmatprep.subr.bf16.mxu0 0
          %1003 = vmatpush1.bf16.msra.mxu0 0
          %1004 = vmatprep.mubr.bf16.mxu0 0
          %1005 = vmatmul.mubr.bf16.gmra.mrb[0].mxu0 %v970
          %v1006 = vpop.f32.mrb[0].mxu0
          %v1007 = vadd.f32 0.0, %v1006
          %v1008 = vpop.f32.mrb[0].mxu0
          %v1009 = vpop.f32.mrb[0].mxu0
          %v1010 = vpop.f32.mrb[0].mxu0
          %1011 = vdwg.mxu0
          %v1012 = vmul.f32 %v1007, %v966
          %v1013 = vpack.c.bf16 %v1012, %v1012
          %v1014 = vld [vmem:[#allocation11] sm:$0xf]
          %v1015 = vld [vmem:[#allocation11 + $0x4] sm:$0xf]
          %v1016 = vld [vmem:[#allocation11 + $0x8] sm:$0xf]
          %v1017 = vld [vmem:[#allocation11 + $0xc] sm:$0xf]
          %v1018 = vld [vmem:[#allocation11 + $0x10] sm:$0xf]
          %v1019 = vld [vmem:[#allocation11 + $0x14] sm:$0xf]
          %v1020 = vld [vmem:[#allocation11 + $0x18] sm:$0xf]
          %v1021 = vld [vmem:[#allocation11 + $0x1c] sm:$0xf]
          %v1022 = vld [vmem:[#allocation11 + $0x20] sm:$0xf]
          %v1023 = vld [vmem:[#allocation11 + $0x24] sm:$0xf]
          %v1024 = vld [vmem:[#allocation11 + $0x28] sm:$0xf]
          %v1025 = vld [vmem:[#allocation11 + $0x2c] sm:$0xf]
          %v1026 = vld [vmem:[#allocation11 + $0x30] sm:$0xf]
          %v1027 = vld [vmem:[#allocation11 + $0x34] sm:$0xf]
          %v1028 = vld [vmem:[#allocation11 + $0x38] sm:$0xf]
          %v1029 = vld [vmem:[#allocation11 + $0x3c] sm:$0xf]
          %v1030 = vld [vmem:[%s8] sm:$0x1]
          %v1032 = vlaneseq
          %v1033 = vshrl.u32 %v1032, 7
          %v1034 = vsub.s32 0, %v1033
          %v1035 = vrot.slane %v1030, %v1034
          %v1053 = vunpack.c.l.b16 %v1014
          %v1054 = vunpack.c.l.b16 %v1015
          %v1055 = vunpack.c.l.b16 %v1016
          %v1056 = vunpack.c.l.b16 %v1017
          %v1057 = vunpack.c.l.b16 %v1018
          %v1058 = vunpack.c.l.b16 %v1019
          %v1059 = vunpack.c.l.b16 %v1020
          %v1060 = vunpack.c.l.b16 %v1021
          %v1061 = vunpack.c.l.b16 %v1022
          %v1062 = vunpack.c.l.b16 %v1023
          %v1063 = vunpack.c.l.b16 %v1024
          %v1064 = vunpack.c.l.b16 %v1025
          %v1065 = vunpack.c.l.b16 %v1026
          %v1066 = vunpack.c.l.b16 %v1027
          %v1067 = vunpack.c.l.b16 %v1028
          %v1068 = vunpack.c.l.b16 %v1029
          %v1069 = vpack.c.b16 %v1054, %v1053
          %v1070 = vpack.c.b16 %v1056, %v1055
          %v1071 = vpack.c.b16 %v1058, %v1057
          %v1072 = vpack.c.b16 %v1060, %v1059
          %v1073 = vpack.c.b16 %v1062, %v1061
          %v1074 = vpack.c.b16 %v1064, %v1063
          %v1075 = vpack.c.b16 %v1066, %v1065
          %v1076 = vpack.c.b16 %v1068, %v1067
          %1085 = vmatprep.subr.bf16.mxu0 0
          %1086 = vmatpush1.bf16.msra.mxu0 %v1069
          %1087 = vmatprep.subr.bf16.mxu0 0
          %1088 = vmatpush1.bf16.msra.mxu0 %v1070
          %1089 = vmatprep.subr.bf16.mxu0 0
          %1090 = vmatpush1.bf16.msra.mxu0 %v1071
          %1091 = vmatprep.subr.bf16.mxu0 0
          %1092 = vmatpush1.bf16.msra.mxu0 %v1072
          %1093 = vmatprep.subr.bf16.mxu0 0
          %1094 = vmatpush1.bf16.msra.mxu0 %v1073
          %1095 = vmatprep.subr.bf16.mxu0 0
          %1096 = vmatpush1.bf16.msra.mxu0 %v1074
          %1097 = vmatprep.subr.bf16.mxu0 0
          %1098 = vmatpush1.bf16.msra.mxu0 %v1075
          %1099 = vmatprep.subr.bf16.mxu0 0
          %1100 = vmatpush1.bf16.msra.mxu0 %v1076
          %1101 = vmatprep.subr.bf16.mxu0 0
          %1102 = vmatpush1.bf16.msra.mxu0 0
          %1103 = vmatprep.subr.bf16.mxu0 0
          %1104 = vmatpush1.bf16.msra.mxu0 0
          %1105 = vmatprep.subr.bf16.mxu0 0
          %1106 = vmatpush1.bf16.msra.mxu0 0
          %1107 = vmatprep.subr.bf16.mxu0 0
          %1108 = vmatpush1.bf16.msra.mxu0 0
          %1109 = vmatprep.subr.bf16.mxu0 0
          %1110 = vmatpush1.bf16.msra.mxu0 0
          %1111 = vmatprep.subr.bf16.mxu0 0
          %1112 = vmatpush1.bf16.msra.mxu0 0
          %1113 = vmatprep.subr.bf16.mxu0 0
          %1114 = vmatpush1.bf16.msra.mxu0 0
          %1115 = vmatprep.subr.bf16.mxu0 0
          %1116 = vmatpush1.bf16.msra.mxu0 0
          %1117 = vmatprep.mubr.bf16.mxu0 0
          %1118 = vmatmul.mubr.bf16.gmra.mrb[0].mxu0 %v1013
          %v1119 = vpop.f32.mrb[0].mxu0
          %v1120 = vadd.f32 %v1035, %v1119
          %v1121 = vpop.f32.mrb[0].mxu0
          %v1122 = vpop.f32.mrb[0].mxu0
          %v1123 = vpop.f32.mrb[0].mxu0
          %1124 = vdwg.mxu0
          %1125 = vst [vmem:[#allocation12] sm:$0xff] %v1120
        $region88: #{tpu_custom_call.1} parent=55 // pred_fallthru
          _
        // Predicated region
        $region89: #{tpu_custom_call.1} parent=55 // pred_check
          %p1126 = pneg %p245
        $region90: #{tpu_custom_call.1} parent=55 // pred_check_branch
          %1128 = sbr.rel (%p1126) target = $region92
        $region91: #{tpu_custom_call.1} parent=55 // pred_region
          %s1130 = ssub.s32 128, 128
          %1131 = vsyncadd [#allocation5], %s1130
          %s1133 = sshll.u32 [#allocation12], 4
          %s1134 = int_to_ptr.vmem [resolvable:$true] %s1133
          %1136 = dma.vmem_to_hbm [thread:$0]  %s1134, 128, %s9, [#allocation5]
        $region92: #{tpu_custom_call.1} parent=55 // pred_fallthru
          _
        // Predicated region
        $region93: #{tpu_custom_call.1} parent=55 // pred_check
          %p1137 = pneg %p245
        $region94: #{tpu_custom_call.1} parent=55 // pred_check_branch
          %1139 = sbr.rel (%p1137) target = $region96
        $region95: #{tpu_custom_call.1} parent=55 // pred_region
          %1140 = dma.done [#allocation5], 128
        $region96: #{tpu_custom_call.1} parent=55 // pred_fallthru
          _
      $region56: #{tpu_custom_call.1} parent=5 // pred_fallthru
        _
      %p1141 = scmp.le.s32.totalorder 2, %s18
      // Predicated region
      $region97: #{tpu_custom_call.1} parent=5 // pred_check
        %p1142 = pneg %p1141
      $region98: #{tpu_custom_call.1} parent=5 // pred_check_branch
        %1144 = sbr.rel (%p1142) target = $region100
      $region99: #{tpu_custom_call.1} parent=5 // pred_region
        %s1145 = ssub.s32 %s18, 2
      $region100: #{tpu_custom_call.1} parent=5 // pred_fallthru
        _
    $region6: #{tpu_custom_call.1} parent=1 // loop_footer
      %s22 = sadd.s32 1, %s18
    $region7: #{tpu_custom_call.1} parent=1 // loop_footer_branch
      %17 = sbr.rel target = $region3
    $region8: #{tpu_custom_call.1} parent=1 // loop_exit
      _
    %1146 = vsyncpa [#allocation4], 1
    %s1147 = scalar_lea.sflag [#allocation4], 1
    %1148 = vsyncpa %s1147, 1
    %1149 = vsyncpa [#allocation7], 1
    %1150 = vsyncpa [#allocation5], 1
    %s1151 = scalar_lea.sflag [#allocation5], 1
    %1152 = vsyncpa %s1151, 1

</llo_original>
